<compile_context>
chip_gen: v7x
topology: tpu7x:2x2x1
jax: 0.10.0
libtpu: 0.0.40
codegen_flags: <defaults>
</compile_context>

<pallas_src>
import functools

import jax
import jax.numpy as jnp
from jax.experimental import pallas as pl
from jax.experimental.pallas import tpu as pltpu


_VMEM_CAP = 56 * 1024 * 1024      # leave Mosaic internal-scratch headroom (v7x: 64 MiB phys)
_VMEM_FLOOR = 32 * 1024 * 1024
_FUSED_BUDGET = 48 * 1024 * 1024  # above this the resident-weight design won't fit v7x


def _round_up(x, m):
    return ((x + m - 1) // m) * m


def _sublane(dtype):
    # 16-bit dtypes pack 16 rows per vreg sublane group; 32-bit pack 8.
    return 16 if jnp.dtype(dtype).itemsize == 2 else 8


# ---------------------------------------------------------------------------
# Path 1: fully fused MLP — grid only over M rows, all weights resident in VMEM.
# ---------------------------------------------------------------------------
def _fused_mlp_kernel(*refs, num_layers):
    """refs = (x_ref, w0, b0, w1, b1, ..., o_ref); wi is (K_i, N_i), bi is (1, N_i)."""
    x_ref, o_ref = refs[0], refs[-1]
    wb = refs[1:-1]
    h = x_ref[...]                       # native dtype; MXU consumes it directly
    compute_dtype = h.dtype
    for i in range(num_layers):
        w = wb[2 * i][...]
        b = wb[2 * i + 1][...]
        acc = jnp.dot(h, w, preferred_element_type=jnp.float32)   # f32 accumulate
        acc = acc + b.astype(jnp.float32)
        if i < num_layers - 1:
            h = jnp.maximum(acc, 0.0).astype(compute_dtype)       # back to working dtype
        else:
            h = acc
    o_ref[...] = h.astype(o_ref.dtype)


def _fused_forward(x2d, prepared, tm, vmem_limit, single_buffer_weights):
    pdims = prepared["pdims"]
    num_layers = prepared["num_layers"]
    in_dim = prepared["in_dim"]
    dtype = x2d.dtype
    itemsize = jnp.dtype(dtype).itemsize
    M = x2d.shape[0]
    grid_m = pl.cdiv(M, tm)

    resident_kw = (dict(pipeline_mode=pl.Buffered(1))
                   if single_buffer_weights else {})

    in_specs = [pl.BlockSpec((tm, in_dim), lambda i: (i, 0))]
    wb_flat = []
    for li, (wt, bp) in enumerate(prepared["weights"]):
        kp, np_ = pdims[li], pdims[li + 1]
        in_specs.append(pl.BlockSpec((kp, np_), lambda i: (0, 0), **resident_kw))
        in_specs.append(pl.BlockSpec((1, np_), lambda i: (0, 0), **resident_kw))
        wb_flat += [wt, bp]
    out_spec = pl.BlockSpec((tm, pdims[-1]), lambda i: (i, 0))

    flops = sum(2 * M * pdims[li] * pdims[li + 1] for li in range(num_layers))
    bytes_accessed = itemsize * (x2d.size + sum(a.size for a in wb_flat)
                                 + M * pdims[-1])

    return pl.pallas_call(
        functools.partial(_fused_mlp_kernel, num_layers=num_layers),
        out_shape=jax.ShapeDtypeStruct((M, pdims[-1]), dtype),
        grid=(grid_m,),
        in_specs=in_specs,
        out_specs=out_spec,
        compiler_params=pltpu.CompilerParams(
            dimension_semantics=("parallel",),
            vmem_limit_bytes=vmem_limit),
        cost_estimate=pl.CostEstimate(flops=flops, transcendentals=0,
                                      bytes_accessed=bytes_accessed),
    )(x2d, *wb_flat)


# ---------------------------------------------------------------------------
# Path 2 (fallback): layer-by-layer tiled matmul + bias (+ReLU) streaming the
# weights over an (M, N, K) grid — used when the resident weight set would not
# fit the fused-path VMEM budget (e.g. v7x's 64 MiB).
# ---------------------------------------------------------------------------
def _linear_kernel(x_ref, w_ref, b_ref, o_ref, acc_ref, *, apply_relu):
    @pl.when(pl.program_id(2) == 0)
    def _init():
        acc_ref[...] = jnp.zeros_like(acc_ref)

    acc_ref[...] += jnp.dot(x_ref[...], w_ref[...],
                            preferred_element_type=jnp.float32)

    @pl.when(pl.program_id(2) == pl.num_programs(2) - 1)
    def _finalize():
        r = acc_ref[...] + b_ref[...].astype(jnp.float32)
        if apply_relu:
            r = jnp.maximum(r, 0.0)
        o_ref[...] = r.astype(o_ref.dtype)


def _pick_n_tile(n, max_tile=256):
    return n if n <= max_tile else max_tile          # n is a 128-multiple (prepared)


def _pick_k_tile(k, max_tile=512):
    # The contraction tile must divide K exactly: a ragged K tile would
    # accumulate garbage from out-of-bounds reads into in-bounds outputs.
    if k <= max_tile:
        return k
    t = (max_tile // 128) * 128
    while t >= 128:
        if k % t == 0:
            return t
        t -= 128
    return k                                         # no clean divisor: keep K resident


def _linear_layer(x2d, wt, b2d, *, apply_relu, tm):
    M, K = x2d.shape
    N = wt.shape[1]
    itemsize = jnp.dtype(x2d.dtype).itemsize
    tn = _pick_n_tile(N)
    tk = _pick_k_tile(K)
    grid = (pl.cdiv(M, tm), pl.cdiv(N, tn), pl.cdiv(K, tk))

    vmem_needed = (2 * (tm * tk + tk * tn + tn + tm * tn) * itemsize
                   + tm * tn * 4)
    vmem_limit = int(min(max(vmem_needed + (4 << 20), _VMEM_FLOOR), _VMEM_CAP))
    cost = pl.CostEstimate(
        flops=2 * M * K * N, transcendentals=0,
        bytes_accessed=itemsize * (M * K + K * N + N + M * N))

    return pl.pallas_call(
        functools.partial(_linear_kernel, apply_relu=apply_relu),
        out_shape=jax.ShapeDtypeStruct((M, N), x2d.dtype),
        grid=grid,
        in_specs=[pl.BlockSpec((tm, tk), lambda i, j, k: (i, k)),
                  pl.BlockSpec((tk, tn), lambda i, j, k: (k, j)),
                  pl.BlockSpec((1, tn), lambda i, j, k: (0, j))],
        out_specs=pl.BlockSpec((tm, tn), lambda i, j, k: (i, j)),
        scratch_shapes=[pltpu.VMEM((tm, tn), jnp.float32)],
        compiler_params=pltpu.CompilerParams(
            dimension_semantics=("parallel", "parallel", "arbitrary"),
            vmem_limit_bytes=vmem_limit),
        cost_estimate=cost,
    )(x2d, wt, b2d)


# ---------------------------------------------------------------------------
# Parameter preparation (one-time) and forward pass.
# ---------------------------------------------------------------------------
def prepare_mlp_params(params, compute_dtype=None):
    """One-time preprocessing, hoisted out of the forward pass.

    params: list of (w, b), PyTorch nn.Linear layout — w: (out, in), b: (out,).
    Weights are transposed to (in, out), output dims zero-padded to 128-lane
    multiples (padded rows/cols/biases are zero, so the math is unchanged),
    and biases reshaped to (1, N).
    """
    num_layers = len(params)
    in_dim = params[0][0].shape[1]
    out_dim = params[-1][0].shape[0]
    if compute_dtype is None:
        compute_dtype = jnp.asarray(params[0][0]).dtype
    dims = [in_dim] + [w.shape[0] for w, _ in params]
    # Layer-0 K stays at the natural input width (x is fed unpadded); later
    # boundaries are padded to 128 lanes (lane-dense stores).
    # TODO(synk): on v6e/v7x a 256 granule better fills the 2x256^2 MXU when the
    # true dims already exceed 128 (generation-conditional; 128 is right for v5e).
    pdims = [in_dim] + [_round_up(d, 128) for d in dims[1:]]

    weights = []
    for li, (w, b) in enumerate(params):
        w = jnp.asarray(w, compute_dtype)
        b = jnp.asarray(b, compute_dtype)
        kp, np_ = pdims[li], pdims[li + 1]
        wt = jnp.zeros((kp, np_), compute_dtype).at[:w.shape[1], :w.shape[0]].set(w.T)
        bp = jnp.zeros((1, np_), compute_dtype).at[0, :b.shape[0]].set(b)
        weights.append((wt, bp))

    return dict(weights=weights, pdims=pdims, num_layers=num_layers,
                in_dim=in_dim, out_dim=out_dim, dtype=compute_dtype)


def mlp_forward(x, prepared, *, block_m=256, force_layerwise=False):
    """Forward pass: ReLU(linear) for all layers except the last (plain linear)."""
    in_dim = prepared["in_dim"]
    out_dim = prepared["out_dim"]
    pdims = prepared["pdims"]
    dtype = prepared["dtype"]
    num_layers = prepared["num_layers"]
    itemsize = jnp.dtype(dtype).itemsize

    orig_shape = x.shape
    x2d = x.reshape(-1, in_dim)
    if x2d.dtype != dtype:
        x2d = x2d.astype(dtype)
    M = x2d.shape[0]

    # Row tile: multiple of the packed sublane count; >= 2 grid steps whenever
    # M allows it so ("parallel",) shards across both v7x TensorCores.
    sub = _sublane(dtype)
    if M <= sub:
        tm = sub
    else:
        tm = max(sub, min(block_m, _round_up(pl.cdiv(M, 2), sub)))

    weight_bytes = sum(w.size + b.size for w, b in prepared["weights"]) * itemsize
    act_f32 = 4 * tm * max(pdims)
    vmem_needed = (weight_bytes                      # resident, single-buffered
                   + 2 * tm * in_dim * itemsize      # double-buffered x tile
                   + 2 * tm * pdims[-1] * itemsize   # double-buffered out tile
                   + 2 * act_f32                     # two live f32 activation tiles
                   + tm * max(pdims) * itemsize)     # low-precision copy for next dot
    vmem_limit = int(min(max(vmem_needed + (4 << 20), _VMEM_FLOOR), _VMEM_CAP))

    if force_layerwise or vmem_needed > _FUSED_BUDGET:
        # Real fallback: stream each layer's weights instead of keeping them
        # resident (intermediates round-trip HBM, but any size fits).
        h = x2d
        for li, (wt, bp) in enumerate(prepared["weights"]):
            h = _linear_layer(h, wt, bp, apply_relu=(li < num_layers - 1), tm=tm)
        out_pad = h
    else:
        try:
            out_pad = _fused_forward(x2d, prepared, tm, vmem_limit,
                                     single_buffer_weights=True)
        except Exception:
            # Some Pallas versions reject pl.Buffered(1) on resident inputs;
            # the double-buffered variant is functionally identical.
            out_pad = _fused_forward(x2d, prepared, tm, vmem_limit,
                                     single_buffer_weights=False)

    out = out_pad if out_pad.shape[1] == out_dim else out_pad[:, :out_dim]
    return out.reshape(*orig_shape[:-1], out_dim)


def init_mlp_params(key, input_dim, hidden_dim, output_dim, num_layers,
                    dtype=jnp.float32):
    """Deterministic init mirroring nn.Linear default (uniform +/- 1/sqrt(fan_in))."""
    h = [hidden_dim] * (num_layers - 1)
    dims_in = [input_dim] + h
    dims_out = h + [output_dim]
    params = []
    for n_in, n_out in zip(dims_in, dims_out):
        key, kw, kb = jax.random.split(key, 3)
        bound = 1.0 / jnp.sqrt(jnp.asarray(n_in, dtype=jnp.float32))
        w = jax.random.uniform(kw, (n_out, n_in), dtype=dtype,
                               minval=-bound, maxval=bound)
        b = jax.random.uniform(kb, (n_out,), dtype=dtype,
                               minval=-bound, maxval=bound)
        params.append((w, b))
    return params


def mlp_reference(x, params):
    """Pure-JAX reference implementation for verification."""
    num_layers = len(params)
    for i, (w, b) in enumerate(params):
        x = x @ w.T + b
        if i < num_layers - 1:
            x = jnp.maximum(x, 0.0)
    return x


if __name__ == "__main__":
    # Small shapes consistent with the module: seq of tokens, MLP over last dim.
    batch, seq = 2, 8
    input_dim, hidden_dim, output_dim, num_layers = 16, 32, 8, 3

    key = jax.random.PRNGKey(0)
    k_x, k_p = jax.random.split(key)
    x = jax.random.normal(k_x, (batch, seq, input_dim), dtype=jnp.float32)
    params = init_mlp_params(k_p, input_dim, hidden_dim, output_dim, num_layers)

    prepared = prepare_mlp_params(params)     # one-time, outside the forward pass
    ref = mlp_reference(x, params)

    # Fused path (weights resident in VMEM).
    out = jax.block_until_ready(mlp_forward(x, prepared))
    assert out.shape == (batch, seq, output_dim), out.shape
    assert jnp.allclose(out, ref, atol=1e-5, rtol=1e-5), "fused path mismatch"

    # Exercise the layer-by-layer fallback path (used when the resident weight
    # set would not fit v7x's VMEM).
    out_lw = jax.block_until_ready(mlp_forward(x, prepared, force_layerwise=True))
    assert jnp.allclose(out_lw, ref, atol=1e-5, rtol=1e-5), "layerwise path mismatch"

    print("KERNEL_OK")
</pallas_src>

<mosaic_0001>
module attributes {stable_mosaic.version = 11 : i64} {
  func.func @_fused_mlp_kernel(%arg0: i32, %arg1: memref<8x16xf32, #tpu.memory_space<vmem>>, %arg2: memref<16x128xf32, #tpu.memory_space<vmem>>, %arg3: memref<1x128xf32, #tpu.memory_space<vmem>>, %arg4: memref<128x128xf32, #tpu.memory_space<vmem>>, %arg5: memref<1x128xf32, #tpu.memory_space<vmem>>, %arg6: memref<128x128xf32, #tpu.memory_space<vmem>>, %arg7: memref<1x128xf32, #tpu.memory_space<vmem>>, %arg8: memref<8x128xf32, #tpu.memory_space<vmem>>) attributes {dimension_semantics = [#tpu.dimension_semantics<parallel>], iteration_bounds = array<i64: 2>, scalar_prefetch = 0 : i64, scratch_operands = 0 : i64, tpu.core_type = #tpu.core_type<tc>, window_params = [{transform_indices = @transform_0, window_bounds = array<i64: 8, 16>}, {pipeline_mode = #tpu.pipeline_mode<synchronous>, transform_indices = @transform_1, window_bounds = array<i64: 16, 128>}, {pipeline_mode = #tpu.pipeline_mode<synchronous>, transform_indices = @transform_2, window_bounds = array<i64: 1, 128>}, {pipeline_mode = #tpu.pipeline_mode<synchronous>, transform_indices = @transform_3, window_bounds = array<i64: 128, 128>}, {pipeline_mode = #tpu.pipeline_mode<synchronous>, transform_indices = @transform_4, window_bounds = array<i64: 1, 128>}, {pipeline_mode = #tpu.pipeline_mode<synchronous>, transform_indices = @transform_5, window_bounds = array<i64: 128, 128>}, {pipeline_mode = #tpu.pipeline_mode<synchronous>, transform_indices = @transform_6, window_bounds = array<i64: 1, 128>}, {transform_indices = @transform_7, window_bounds = array<i64: 8, 128>}]} {
    %c0 = arith.constant 0 : index
    %c0_0 = arith.constant 0 : index
    %0 = vector.load %arg1[%c0, %c0_0] : memref<8x16xf32, #tpu.memory_space<vmem>>, vector<8x16xf32>
    %c0_1 = arith.constant 0 : index
    %c0_2 = arith.constant 0 : index
    %1 = vector.load %arg2[%c0_1, %c0_2] : memref<16x128xf32, #tpu.memory_space<vmem>>, vector<16x128xf32>
    %c0_3 = arith.constant 0 : index
    %c0_4 = arith.constant 0 : index
    %2 = vector.load %arg3[%c0_3, %c0_4] : memref<1x128xf32, #tpu.memory_space<vmem>>, vector<1x128xf32>
    %cst = arith.constant dense<0.000000e+00> : vector<8x128xf32>
    %3 = tpu.matmul %0, %1, %cst {dimension_numbers = #tpu.dot_dimension_numbers<[1], [0], [0], [1], [0, 0, 1, 1], [], []>} : vector<8x16xf32>, vector<16x128xf32>, vector<8x128xf32> -> vector<8x128xf32>
    %4 = vector.broadcast %2 : vector<1x128xf32> to vector<8x128xf32>
    %5 = arith.addf %3, %4 : vector<8x128xf32>
    %cst_5 = arith.constant 0.000000e+00 : f32
    %6 = vector.broadcast %cst_5 : f32 to vector<8x128xf32>
    %7 = arith.maximumf %5, %6 : vector<8x128xf32>
    %c0_6 = arith.constant 0 : index
    %c0_7 = arith.constant 0 : index
    %8 = vector.load %arg4[%c0_6, %c0_7] : memref<128x128xf32, #tpu.memory_space<vmem>>, vector<128x128xf32>
    %c0_8 = arith.constant 0 : index
    %c0_9 = arith.constant 0 : index
    %9 = vector.load %arg5[%c0_8, %c0_9] : memref<1x128xf32, #tpu.memory_space<vmem>>, vector<1x128xf32>
    %cst_10 = arith.constant dense<0.000000e+00> : vector<8x128xf32>
    %10 = tpu.matmul %7, %8, %cst_10 {dimension_numbers = #tpu.dot_dimension_numbers<[1], [0], [0], [1], [0, 0, 1, 1], [], []>} : vector<8x128xf32>, vector<128x128xf32>, vector<8x128xf32> -> vector<8x128xf32>
    %11 = vector.broadcast %9 : vector<1x128xf32> to vector<8x128xf32>
    %12 = arith.addf %10, %11 : vector<8x128xf32>
    %cst_11 = arith.constant 0.000000e+00 : f32
    %13 = vector.broadcast %cst_11 : f32 to vector<8x128xf32>
    %14 = arith.maximumf %12, %13 : vector<8x128xf32>
    %c0_12 = arith.constant 0 : index
    %c0_13 = arith.constant 0 : index
    %15 = vector.load %arg6[%c0_12, %c0_13] : memref<128x128xf32, #tpu.memory_space<vmem>>, vector<128x128xf32>
    %c0_14 = arith.constant 0 : index
    %c0_15 = arith.constant 0 : index
    %16 = vector.load %arg7[%c0_14, %c0_15] : memref<1x128xf32, #tpu.memory_space<vmem>>, vector<1x128xf32>
    %cst_16 = arith.constant dense<0.000000e+00> : vector<8x128xf32>
    %17 = tpu.matmul %14, %15, %cst_16 {dimension_numbers = #tpu.dot_dimension_numbers<[1], [0], [0], [1], [0, 0, 1, 1], [], []>} : vector<8x128xf32>, vector<128x128xf32>, vector<8x128xf32> -> vector<8x128xf32>
    %18 = vector.broadcast %16 : vector<1x128xf32> to vector<8x128xf32>
    %19 = arith.addf %17, %18 : vector<8x128xf32>
    %c0_17 = arith.constant 0 : index
    %c0_18 = arith.constant 0 : index
    %20 = vector.load %arg8[%c0_17, %c0_18] : memref<8x128xf32, #tpu.memory_space<vmem>>, vector<8x128xf32>
    tpu.vector_store %arg8[%c0_17, %c0_18], %19 {strides = array<i32>} : memref<8x128xf32, #tpu.memory_space<vmem>>, vector<8x128xf32>,
    return
  }
  func.func @transform_0(%arg0: i32) -> (i32, i32) {
    %c0_i32 = arith.constant 0 : i32
    %c0_i32_0 = arith.constant 0 : i32
    return %arg0, %c0_i32 : i32, i32
  }
  func.func @transform_1(%arg0: i32) -> (i32, i32) {
    %c0_i32 = arith.constant 0 : i32
    %c0_i32_0 = arith.constant 0 : i32
    %c0_i32_1 = arith.constant 0 : i32
    return %c0_i32, %c0_i32_0 : i32, i32
  }
  func.func @transform_2(%arg0: i32) -> (i32, i32) {
    %c0_i32 = arith.constant 0 : i32
    %c0_i32_0 = arith.constant 0 : i32
    %c0_i32_1 = arith.constant 0 : i32
    return %c0_i32, %c0_i32_0 : i32, i32
  }
  func.func @transform_3(%arg0: i32) -> (i32, i32) {
    %c0_i32 = arith.constant 0 : i32
    %c0_i32_0 = arith.constant 0 : i32
    %c0_i32_1 = arith.constant 0 : i32
    return %c0_i32, %c0_i32_0 : i32, i32
  }
  func.func @transform_4(%arg0: i32) -> (i32, i32) {
    %c0_i32 = arith.constant 0 : i32
    %c0_i32_0 = arith.constant 0 : i32
    %c0_i32_1 = arith.constant 0 : i32
    return %c0_i32, %c0_i32_0 : i32, i32
  }
  func.func @transform_5(%arg0: i32) -> (i32, i32) {
    %c0_i32 = arith.constant 0 : i32
    %c0_i32_0 = arith.constant 0 : i32
    %c0_i32_1 = arith.constant 0 : i32
    return %c0_i32, %c0_i32_0 : i32, i32
  }
  func.func @transform_6(%arg0: i32) -> (i32, i32) {
    %c0_i32 = arith.constant 0 : i32
    %c0_i32_0 = arith.constant 0 : i32
    %c0_i32_1 = arith.constant 0 : i32
    return %c0_i32, %c0_i32_0 : i32, i32
  }
  func.func @transform_7(%arg0: i32) -> (i32, i32) {
    %c0_i32 = arith.constant 0 : i32
    %c0_i32_0 = arith.constant 0 : i32
    return %arg0, %c0_i32 : i32, i32
  }
}

module attributes {stable_mosaic.version = 11 : i64} {
  func.func @_fused_mlp_kernel(%arg0: i32, %arg1: memref<8x16xf32, #tpu.memory_space<vmem>>, %arg2: memref<16x128xf32, #tpu.memory_space<vmem>>, %arg3: memref<1x128xf32, #tpu.memory_space<vmem>>, %arg4: memref<128x128xf32, #tpu.memory_space<vmem>>, %arg5: memref<1x128xf32, #tpu.memory_space<vmem>>, %arg6: memref<128x128xf32, #tpu.memory_space<vmem>>, %arg7: memref<1x128xf32, #tpu.memory_space<vmem>>, %arg8: memref<8x128xf32, #tpu.memory_space<vmem>>) attributes {dimension_semantics = [#tpu.dimension_semantics<parallel>], iteration_bounds = array<i64: 2>, scalar_prefetch = 0 : i64, scratch_operands = 0 : i64, tpu.core_type = #tpu.core_type<tc>, window_params = [{transform_indices = @transform_0, window_bounds = array<i64: 8, 16>}, {pipeline_mode = #tpu.pipeline_mode<synchronous>, transform_indices = @transform_1, window_bounds = array<i64: 16, 128>}, {pipeline_mode = #tpu.pipeline_mode<synchronous>, transform_indices = @transform_2, window_bounds = array<i64: 1, 128>}, {pipeline_mode = #tpu.pipeline_mode<synchronous>, transform_indices = @transform_3, window_bounds = array<i64: 128, 128>}, {pipeline_mode = #tpu.pipeline_mode<synchronous>, transform_indices = @transform_4, window_bounds = array<i64: 1, 128>}, {pipeline_mode = #tpu.pipeline_mode<synchronous>, transform_indices = @transform_5, window_bounds = array<i64: 128, 128>}, {pipeline_mode = #tpu.pipeline_mode<synchronous>, transform_indices = @transform_6, window_bounds = array<i64: 1, 128>}, {transform_indices = @transform_7, window_bounds = array<i64: 8, 128>}]} {
    %c0 = arith.constant 0 : index
    %c0_0 = arith.constant 0 : index
    %0 = vector.load %arg1[%c0, %c0_0] : memref<8x16xf32, #tpu.memory_space<vmem>>, vector<8x16xf32>
    %c0_1 = arith.constant 0 : index
    %c0_2 = arith.constant 0 : index
    %1 = vector.load %arg2[%c0_1, %c0_2] : memref<16x128xf32, #tpu.memory_space<vmem>>, vector<16x128xf32>
    %c0_3 = arith.constant 0 : index
    %c0_4 = arith.constant 0 : index
    %2 = vector.load %arg3[%c0_3, %c0_4] : memref<1x128xf32, #tpu.memory_space<vmem>>, vector<1x128xf32>
    %cst = arith.constant dense<0.000000e+00> : vector<8x128xf32>
    %3 = tpu.matmul %0, %1, %cst {dimension_numbers = #tpu.dot_dimension_numbers<[1], [0], [0], [1], [0, 0, 1, 1], [], []>} : vector<8x16xf32>, vector<16x128xf32>, vector<8x128xf32> -> vector<8x128xf32>
    %4 = vector.broadcast %2 : vector<1x128xf32> to vector<8x128xf32>
    %5 = arith.addf %3, %4 : vector<8x128xf32>
    %cst_5 = arith.constant 0.000000e+00 : f32
    %6 = vector.broadcast %cst_5 : f32 to vector<8x128xf32>
    %7 = arith.maximumf %5, %6 : vector<8x128xf32>
    %c0_6 = arith.constant 0 : index
    %c0_7 = arith.constant 0 : index
    %8 = vector.load %arg4[%c0_6, %c0_7] : memref<128x128xf32, #tpu.memory_space<vmem>>, vector<128x128xf32>
    %c0_8 = arith.constant 0 : index
    %c0_9 = arith.constant 0 : index
    %9 = vector.load %arg5[%c0_8, %c0_9] : memref<1x128xf32, #tpu.memory_space<vmem>>, vector<1x128xf32>
    %cst_10 = arith.constant dense<0.000000e+00> : vector<8x128xf32>
    %10 = tpu.matmul %7, %8, %cst_10 {dimension_numbers = #tpu.dot_dimension_numbers<[1], [0], [0], [1], [0, 0, 1, 1], [], []>} : vector<8x128xf32>, vector<128x128xf32>, vector<8x128xf32> -> vector<8x128xf32>
    %11 = vector.broadcast %9 : vector<1x128xf32> to vector<8x128xf32>
    %12 = arith.addf %10, %11 : vector<8x128xf32>
    %cst_11 = arith.constant 0.000000e+00 : f32
    %13 = vector.broadcast %cst_11 : f32 to vector<8x128xf32>
    %14 = arith.maximumf %12, %13 : vector<8x128xf32>
    %c0_12 = arith.constant 0 : index
    %c0_13 = arith.constant 0 : index
    %15 = vector.load %arg6[%c0_12, %c0_13] : memref<128x128xf32, #tpu.memory_space<vmem>>, vector<128x128xf32>
    %c0_14 = arith.constant 0 : index
    %c0_15 = arith.constant 0 : index
    %16 = vector.load %arg7[%c0_14, %c0_15] : memref<1x128xf32, #tpu.memory_space<vmem>>, vector<1x128xf32>
    %cst_16 = arith.constant dense<0.000000e+00> : vector<8x128xf32>
    %17 = tpu.matmul %14, %15, %cst_16 {dimension_numbers = #tpu.dot_dimension_numbers<[1], [0], [0], [1], [0, 0, 1, 1], [], []>} : vector<8x128xf32>, vector<128x128xf32>, vector<8x128xf32> -> vector<8x128xf32>
    %18 = vector.broadcast %16 : vector<1x128xf32> to vector<8x128xf32>
    %19 = arith.addf %17, %18 : vector<8x128xf32>
    %c0_17 = arith.constant 0 : index
    %c0_18 = arith.constant 0 : index
    %20 = vector.load %arg8[%c0_17, %c0_18] : memref<8x128xf32, #tpu.memory_space<vmem>>, vector<8x128xf32>
    tpu.vector_store %arg8[%c0_17, %c0_18], %19 {strides = array<i32>} : memref<8x128xf32, #tpu.memory_space<vmem>>, vector<8x128xf32>,
    return
  }
  func.func @transform_0(%arg0: i32) -> (i32, i32) {
    %c0_i32 = arith.constant 0 : i32
    %c0_i32_0 = arith.constant 0 : i32
    return %arg0, %c0_i32 : i32, i32
  }
  func.func @transform_1(%arg0: i32) -> (i32, i32) {
    %c0_i32 = arith.constant 0 : i32
    %c0_i32_0 = arith.constant 0 : i32
    %c0_i32_1 = arith.constant 0 : i32
    return %c0_i32, %c0_i32_0 : i32, i32
  }
  func.func @transform_2(%arg0: i32) -> (i32, i32) {
    %c0_i32 = arith.constant 0 : i32
    %c0_i32_0 = arith.constant 0 : i32
    %c0_i32_1 = arith.constant 0 : i32
    return %c0_i32, %c0_i32_0 : i32, i32
  }
  func.func @transform_3(%arg0: i32) -> (i32, i32) {
    %c0_i32 = arith.constant 0 : i32
    %c0_i32_0 = arith.constant 0 : i32
    %c0_i32_1 = arith.constant 0 : i32
    return %c0_i32, %c0_i32_0 : i32, i32
  }
  func.func @transform_4(%arg0: i32) -> (i32, i32) {
    %c0_i32 = arith.constant 0 : i32
    %c0_i32_0 = arith.constant 0 : i32
    %c0_i32_1 = arith.constant 0 : i32
    return %c0_i32, %c0_i32_0 : i32, i32
  }
  func.func @transform_5(%arg0: i32) -> (i32, i32) {
    %c0_i32 = arith.constant 0 : i32
    %c0_i32_0 = arith.constant 0 : i32
    %c0_i32_1 = arith.constant 0 : i32
    return %c0_i32, %c0_i32_0 : i32, i32
  }
  func.func @transform_6(%arg0: i32) -> (i32, i32) {
    %c0_i32 = arith.constant 0 : i32
    %c0_i32_0 = arith.constant 0 : i32
    %c0_i32_1 = arith.constant 0 : i32
    return %c0_i32, %c0_i32_0 : i32, i32
  }
  func.func @transform_7(%arg0: i32) -> (i32, i32) {
    %c0_i32 = arith.constant 0 : i32
    %c0_i32_0 = arith.constant 0 : i32
    return %arg0, %c0_i32 : i32, i32
  }
}

</mosaic_0001>

<llo_original>
// kernel: tpu_custom_call.1
$region0: #{tpu_custom_call.1}
  #allocation0 [shape = 'u32[]', space=smem, size = 0x4, offset = 0x4, fixed_abs, tag = 'smem constant byte address 0x4 - core index']
  #allocation1 [shape = 'u32[144,128]{1,0:T(1,128)}', space=vmem, size = 0x12000, scoped, tag = 'internal scratch']
  %s0 = inlined_call_operand.hbm [shape: f32[16,16], index: 0, kind: input, shape index: {}]
  %s1 = inlined_call_operand.hbm [shape: f32[16,128], index: 1, kind: input, shape index: {}]
  %s2 = inlined_call_operand.vmem [shape: f32[1,128], index: 2, kind: input, shape index: {}]
  %s3 = inlined_call_operand.hbm [shape: f32[128,128], index: 3, kind: input, shape index: {}]
  %s4 = inlined_call_operand.vmem [shape: f32[1,128], index: 4, kind: input, shape index: {}]
  %s5 = inlined_call_operand.hbm [shape: f32[128,128], index: 5, kind: input, shape index: {}]
  %s6 = inlined_call_operand.vmem [shape: f32[1,128], index: 6, kind: input, shape index: {}]
  %s7 = inlined_call_operand.hbm [shape: f32[16,128], index: 7, kind: output, shape index: {}]
  %s8 = sld [smem:[#allocation0]]
  $region77: #{tpu_custom_call.1} parent=0
    _
  %s10 = ssub.s32 1, %s8
  %s11 = scalar_select 0, %s10, %s8
  $region1: #{tpu_custom_call.1} parent=0
    #allocation2 [shape = 'u8[8192]{0}', space=vmem, size = 0x2000, scoped, tag = 'input window, operand 0']
    #allocation3 [shape = 's32[2]{0}', space=sflag, size = 0x8, scoped, tag = 'scoped memory for tpu_custom_call.1']
    #allocation4 [shape = 's32[2]{0}', space=sflag, size = 0x8, scoped, tag = 'scoped memory for tpu_custom_call.1']
    #allocation5 [shape = 'u8[8192]{0}', space=vmem, size = 0x2000, scoped, tag = 'input window, operand 1, single buffered']
    #allocation6 [shape = 's32[1]{0}', space=sflag, size = 0x4, scoped, tag = 'scoped memory for tpu_custom_call.1']
    #allocation7 [shape = 'u8[65536]{0}', space=vmem, size = 0x10000, scoped, tag = 'input window, operand 3, single buffered']
    #allocation8 [shape = 'u8[65536]{0}', space=vmem, size = 0x10000, scoped, tag = 'input window, operand 5, single buffered']
    #allocation9 [shape = 's32[1]{0}', space=sflag, size = 0x4, scoped, tag = 'scoped memory for tpu_custom_call.1']
    #allocation10 [shape = 'u8[8192]{0}', space=vmem, size = 0x2000, scoped, tag = 'output window, operand 0']
    %12 = vsyncpa [#allocation3], 0
    %s13 = scalar_lea.sflag [#allocation3], 1
    %14 = vsyncpa %s13, 0
    %15 = vsyncpa [#allocation6], 0
    %16 = vsyncpa [#allocation9], 0
    %17 = vsyncpa [#allocation4], 0
    %s18 = scalar_lea.sflag [#allocation4], 1
    %19 = vsyncpa %s18, 0
    loop: start=0, step=1, limit=4
    $region2: #{tpu_custom_call.1} parent=1 // loop_pre_header
      _
    $region3: #{tpu_custom_call.1} parent=1 // loop_header
      %s21 = sphi 0, %s25
      %p22 = scmp.ge.s32.totalorder %s21, 4
      %s31 = sphi 0, %s33
      %s34 = sphi 0, %s31
      %s35 = sphi 0, %s34
      %s51 = sphi 0, %s35
      %s55 = sphi 0, %s55
      %s57 = sphi 0, %s55
      %s58 = sphi 0, %s57
      %s72 = sphi 0, %s58
      %s76 = sphi 0, %s76
      %s78 = sphi 0, %s76
      %s79 = sphi 0, %s78
      %s93 = sphi 0, %s79
      %s97 = sphi 0, %s97
      %s99 = sphi 0, %s97
      %s100 = sphi 0, %s99
      %s114 = sphi 0, %s100
      %s118 = sphi 0, %s118
      %s120 = sphi 0, %s118
      %s121 = sphi 0, %s120
      %s135 = sphi 0, %s121
      %s139 = sphi 0, %s139
      %s141 = sphi 0, %s139
      %s142 = sphi 0, %s141
      %s156 = sphi 0, %s142
      %s160 = sphi 0, %s160
      %s162 = sphi 0, %s160
      %s163 = sphi 0, %s162
      %s177 = sphi 0, %s163
      %s183 = sphi 0, %s185
      %s186 = sphi 0, %s183
      %s187 = sphi 0, %s186
      %s203 = sphi 0, %s187
    $region4: #{tpu_custom_call.1} parent=1 // loop_header_branch
      %24 = sbr.rel (%p22) target = $region8
    $region5: #{tpu_custom_call.1} parent=1 // loop_body
      %s26 = ssub.s32 %s21, 1
      %s27 = ssub.s32 %s21, 2
      %s28 = sadd.s32 %s21, 1
      %s29 = ssub.s32 %s21, %s28
      %p30 = scmp.eq.s32.totalorder %s29, 0
      %s32 = sadd.s32 %s31, 1
      %s33 = scalar_select %p30, %s31, %s32
      %p36 = pneg %p30
      %p37 = scmp.eq.s32.totalorder %s21, 1
      %p38 = por %p36, %p37
      %p39 = scmp.ne.s32.totalorder %s31, %s34
      %p40 = scmp.eq.s32.totalorder %s21, 0
      %p41 = por %p39, %p40
      %p42 = scmp.ne.s32.totalorder %s31, %s34
      %p43 = scmp.eq.s32.totalorder %s26, 1
      %p44 = por %p42, %p43
      %p45 = scmp.ne.s32.totalorder %s34, %s35
      %p46 = scmp.eq.s32.totalorder %s26, 0
      %p47 = por %p45, %p46
      %p48 = scmp.ne.s32.totalorder %s34, %s35
      %p49 = scmp.eq.s32.totalorder %s27, 1
      %p50 = por %p48, %p49
      %p52 = scmp.ne.s32.totalorder %s35, %s51
      %p53 = scmp.eq.s32.totalorder %s27, 0
      %p54 = por %p52, %p53
      %s56 = sadd.s32 %s55, 1
      %p59 = scmp.eq.s32.totalorder %s21, 1
      %p60 = scmp.ne.s32.totalorder %s55, %s57
      %p61 = scmp.eq.s32.totalorder %s21, 0
      %p62 = por %p60, %p61
      %p63 = scmp.ne.s32.totalorder %s55, %s57
      %p64 = scmp.eq.s32.totalorder %s26, 1
      %p65 = por %p63, %p64
      %p66 = scmp.ne.s32.totalorder %s57, %s58
      %p67 = scmp.eq.s32.totalorder %s26, 0
      %p68 = por %p66, %p67
      %p69 = scmp.ne.s32.totalorder %s57, %s58
      %p70 = scmp.eq.s32.totalorder %s27, 1
      %p71 = por %p69, %p70
      %p73 = scmp.ne.s32.totalorder %s58, %s72
      %p74 = scmp.eq.s32.totalorder %s27, 0
      %p75 = por %p73, %p74
      %s77 = sadd.s32 %s76, 1
      %p80 = scmp.eq.s32.totalorder %s21, 1
      %p81 = scmp.ne.s32.totalorder %s76, %s78
      %p82 = scmp.eq.s32.totalorder %s21, 0
      %p83 = por %p81, %p82
      %p84 = scmp.ne.s32.totalorder %s76, %s78
      %p85 = scmp.eq.s32.totalorder %s26, 1
      %p86 = por %p84, %p85
      %p87 = scmp.ne.s32.totalorder %s78, %s79
      %p88 = scmp.eq.s32.totalorder %s26, 0
      %p89 = por %p87, %p88
      %p90 = scmp.ne.s32.totalorder %s78, %s79
      %p91 = scmp.eq.s32.totalorder %s27, 1
      %p92 = por %p90, %p91
      %p94 = scmp.ne.s32.totalorder %s79, %s93
      %p95 = scmp.eq.s32.totalorder %s27, 0
      %p96 = por %p94, %p95
      %s98 = sadd.s32 %s97, 1
      %p101 = scmp.eq.s32.totalorder %s21, 1
      %p102 = scmp.ne.s32.totalorder %s97, %s99
      %p103 = scmp.eq.s32.totalorder %s21, 0
      %p104 = por %p102, %p103
      %p105 = scmp.ne.s32.totalorder %s97, %s99
      %p106 = scmp.eq.s32.totalorder %s26, 1
      %p107 = por %p105, %p106
      %p108 = scmp.ne.s32.totalorder %s99, %s100
      %p109 = scmp.eq.s32.totalorder %s26, 0
      %p110 = por %p108, %p109
      %p111 = scmp.ne.s32.totalorder %s99, %s100
      %p112 = scmp.eq.s32.totalorder %s27, 1
      %p113 = por %p111, %p112
      %p115 = scmp.ne.s32.totalorder %s100, %s114
      %p116 = scmp.eq.s32.totalorder %s27, 0
      %p117 = por %p115, %p116
      %s119 = sadd.s32 %s118, 1
      %p122 = scmp.eq.s32.totalorder %s21, 1
      %p123 = scmp.ne.s32.totalorder %s118, %s120
      %p124 = scmp.eq.s32.totalorder %s21, 0
      %p125 = por %p123, %p124
      %p126 = scmp.ne.s32.totalorder %s118, %s120
      %p127 = scmp.eq.s32.totalorder %s26, 1
      %p128 = por %p126, %p127
      %p129 = scmp.ne.s32.totalorder %s120, %s121
      %p130 = scmp.eq.s32.totalorder %s26, 0
      %p131 = por %p129, %p130
      %p132 = scmp.ne.s32.totalorder %s120, %s121
      %p133 = scmp.eq.s32.totalorder %s27, 1
      %p134 = por %p132, %p133
      %p136 = scmp.ne.s32.totalorder %s121, %s135
      %p137 = scmp.eq.s32.totalorder %s27, 0
      %p138 = por %p136, %p137
      %s140 = sadd.s32 %s139, 1
      %p143 = scmp.eq.s32.totalorder %s21, 1
      %p144 = scmp.ne.s32.totalorder %s139, %s141
      %p145 = scmp.eq.s32.totalorder %s21, 0
      %p146 = por %p144, %p145
      %p147 = scmp.ne.s32.totalorder %s139, %s141
      %p148 = scmp.eq.s32.totalorder %s26, 1
      %p149 = por %p147, %p148
      %p150 = scmp.ne.s32.totalorder %s141, %s142
      %p151 = scmp.eq.s32.totalorder %s26, 0
      %p152 = por %p150, %p151
      %p153 = scmp.ne.s32.totalorder %s141, %s142
      %p154 = scmp.eq.s32.totalorder %s27, 1
      %p155 = por %p153, %p154
      %p157 = scmp.ne.s32.totalorder %s142, %s156
      %p158 = scmp.eq.s32.totalorder %s27, 0
      %p159 = por %p157, %p158
      %s161 = sadd.s32 %s160, 1
      %p164 = scmp.eq.s32.totalorder %s21, 1
      %p165 = scmp.ne.s32.totalorder %s160, %s162
      %p166 = scmp.eq.s32.totalorder %s21, 0
      %p167 = por %p165, %p166
      %p168 = scmp.ne.s32.totalorder %s160, %s162
      %p169 = scmp.eq.s32.totalorder %s26, 1
      %p170 = por %p168, %p169
      %p171 = scmp.ne.s32.totalorder %s162, %s163
      %p172 = scmp.eq.s32.totalorder %s26, 0
      %p173 = por %p171, %p172
      %p174 = scmp.ne.s32.totalorder %s162, %s163
      %p175 = scmp.eq.s32.totalorder %s27, 1
      %p176 = por %p174, %p175
      %p178 = scmp.ne.s32.totalorder %s163, %s177
      %p179 = scmp.eq.s32.totalorder %s27, 0
      %p180 = por %p178, %p179
      %s181 = ssub.s32 %s21, %s28
      %p182 = scmp.eq.s32.totalorder %s181, 0
      %s184 = sadd.s32 %s183, 1
      %s185 = scalar_select %p182, %s183, %s184
      %p188 = pneg %p182
      %p189 = scmp.eq.s32.totalorder %s21, 1
      %p190 = por %p188, %p189
      %p191 = scmp.ne.s32.totalorder %s183, %s186
      %p192 = scmp.eq.s32.totalorder %s21, 0
      %p193 = por %p191, %p192
      %p194 = scmp.ne.s32.totalorder %s183, %s186
      %p195 = scmp.eq.s32.totalorder %s26, 1
      %p196 = por %p194, %p195
      %p197 = scmp.ne.s32.totalorder %s186, %s187
      %p198 = scmp.eq.s32.totalorder %s26, 0
      %p199 = por %p197, %p198
      %p200 = scmp.ne.s32.totalorder %s186, %s187
      %p201 = scmp.eq.s32.totalorder %s27, 1
      %p202 = por %p200, %p201
      %p204 = scmp.ne.s32.totalorder %s187, %s203
      %p205 = scmp.eq.s32.totalorder %s27, 0
      %p206 = por %p204, %p205
      %p207 = scmp.le.s32.totalorder 1, %s21
      %p208 = scmp.lt.s32.totalorder %s21, 3
      %p209 = pnand %p207, %p208
      %p210 = pneg %p209
      // Predicated region
      $region9: #{tpu_custom_call.1} parent=5 // pred_check
        _
      $region10: #{tpu_custom_call.1} parent=5 // pred_check_branch
        %212 = sbr.rel (%p209) target = $region12
      $region11: #{tpu_custom_call.1} parent=5 // pred_region
        %s213 = ssub.s32 %s21, 1
        // Predicated region
        $region13: #{tpu_custom_call.1} parent=11 // pred_check
          %p214 = pneg %p68
        $region14: #{tpu_custom_call.1} parent=11 // pred_check_branch
          %216 = sbr.rel (%p214) target = $region16
        $region15: #{tpu_custom_call.1} parent=11 // pred_region
          %s218 = ssub.s32 256, 256
          %219 = vsyncadd [#allocation6], %s218
          %s220 = sshll.u32 [#allocation5], 4
          %s221 = int_to_ptr.vmem [resolvable:$true] %s220
          %226 = dma.hbm_to_vmem [thread:$0]  %s1, 256, %s221, [#allocation6], 128, 128, 8
        $region16: #{tpu_custom_call.1} parent=11 // pred_fallthru
          _
        // Predicated region
        $region17: #{tpu_custom_call.1} parent=11 // pred_check
          %p227 = pneg %p89
        $region18: #{tpu_custom_call.1} parent=11 // pred_check_branch
          %229 = sbr.rel (%p227) target = $region20
        $region19: #{tpu_custom_call.1} parent=11 // pred_region
          _
        $region20: #{tpu_custom_call.1} parent=11 // pred_fallthru
          _
        // Predicated region
        $region21: #{tpu_custom_call.1} parent=11 // pred_check
          %p230 = pneg %p110
        $region22: #{tpu_custom_call.1} parent=11 // pred_check_branch
          %232 = sbr.rel (%p230) target = $region24
        $region23: #{tpu_custom_call.1} parent=11 // pred_region
          %s234 = ssub.s32 2048, 2048
          %235 = vsyncadd [#allocation6], %s234
          %s236 = sshll.u32 [#allocation7], 4
          %s237 = int_to_ptr.vmem [resolvable:$true] %s236
          %242 = dma.hbm_to_vmem [thread:$0]  %s3, 2048, %s237, [#allocation6], 128, 128, 8
        $region24: #{tpu_custom_call.1} parent=11 // pred_fallthru
          _
        // Predicated region
        $region25: #{tpu_custom_call.1} parent=11 // pred_check
          %p243 = pneg %p131
        $region26: #{tpu_custom_call.1} parent=11 // pred_check_branch
          %245 = sbr.rel (%p243) target = $region28
        $region27: #{tpu_custom_call.1} parent=11 // pred_region
          _
        $region28: #{tpu_custom_call.1} parent=11 // pred_fallthru
          _
        // Predicated region
        $region29: #{tpu_custom_call.1} parent=11 // pred_check
          %p246 = pneg %p152
        $region30: #{tpu_custom_call.1} parent=11 // pred_check_branch
          %248 = sbr.rel (%p246) target = $region32
        $region31: #{tpu_custom_call.1} parent=11 // pred_region
          %s250 = ssub.s32 2048, 2048
          %251 = vsyncadd [#allocation9], %s250
          %s252 = sshll.u32 [#allocation8], 4
          %s253 = int_to_ptr.vmem [resolvable:$true] %s252
          %258 = dma.hbm_to_vmem [thread:$0]  %s5, 2048, %s253, [#allocation9], 128, 128, 8
        $region32: #{tpu_custom_call.1} parent=11 // pred_fallthru
          _
        // Predicated region
        $region33: #{tpu_custom_call.1} parent=11 // pred_check
          %p259 = pneg %p173
        $region34: #{tpu_custom_call.1} parent=11 // pred_check_branch
          %261 = sbr.rel (%p259) target = $region36
        $region35: #{tpu_custom_call.1} parent=11 // pred_region
          _
        $region36: #{tpu_custom_call.1} parent=11 // pred_fallthru
          _
      $region12: #{tpu_custom_call.1} parent=5 // pred_fallthru
        _
      %p262 = scmp.lt.s32.totalorder %s21, 2
      // Predicated region
      $region37: #{tpu_custom_call.1} parent=5 // pred_check
        %p263 = pneg %p262
      $region38: #{tpu_custom_call.1} parent=5 // pred_check_branch
        %265 = sbr.rel (%p263) target = $region40
      $region39: #{tpu_custom_call.1} parent=5 // pred_region
        // Predicated region
        $region41: #{tpu_custom_call.1} parent=39 // pred_check
          %p266 = pneg %p41
        $region42: #{tpu_custom_call.1} parent=39 // pred_check_branch
          %268 = sbr.rel (%p266) target = $region44
        $region43: #{tpu_custom_call.1} parent=39 // pred_region
          %s269 = sand.u32 %s31, 1
          %s270 = scalar_lea.sflag [#allocation3], %s269
          %s271 = sand.u32 %s31, 1
          %s272 = smul.addr %s271, 8
          %s273 = scalar_lea.vmem [#allocation2], %s272
          %s275 = ssub.s32 128, 128
          %276 = vsyncadd %s270, %s275
          %s277 = smul.addr %s21, 128
          %s278 = scalar_lea.hbm %s0, %s277
          %s280 = sshll.u32 %s273, 4
          %s281 = int_to_ptr.vmem [resolvable:$true] %s280
          %283 = dma.hbm_to_vmem [thread:$0]  %s278, 128, %s281, %s270
        $region44: #{tpu_custom_call.1} parent=39 // pred_fallthru
          _
      $region40: #{tpu_custom_call.1} parent=5 // pred_fallthru
        _
      %p284 = scmp.le.s32.totalorder 1, %s21
      %p285 = scmp.lt.s32.totalorder %s21, 3
      %p286 = pnand %p284, %p285
      %p287 = pneg %p286
      // Predicated region
      $region45: #{tpu_custom_call.1} parent=5 // pred_check
        _
      $region46: #{tpu_custom_call.1} parent=5 // pred_check_branch
        %289 = sbr.rel (%p286) target = $region48
      $region47: #{tpu_custom_call.1} parent=5 // pred_region
        %s290 = ssub.s32 %s21, 1
        %s291 = sand.u32 %s34, 1
        %s292 = scalar_lea.sflag [#allocation3], %s291
        %s293 = sand.u32 %s34, 1
        %s294 = smul.addr %s293, 8
        %s295 = scalar_lea.vmem [#allocation2], %s294
        // Predicated region
        $region49: #{tpu_custom_call.1} parent=47 // pred_check
          %p296 = pneg %p47
        $region50: #{tpu_custom_call.1} parent=47 // pred_check_branch
          %298 = sbr.rel (%p296) target = $region52
        $region51: #{tpu_custom_call.1} parent=47 // pred_region
          %299 = dma.done %s292, 128
        $region52: #{tpu_custom_call.1} parent=47 // pred_fallthru
          _
        // Predicated region
        $region53: #{tpu_custom_call.1} parent=47 // pred_check
          %p300 = pneg %p68
        $region54: #{tpu_custom_call.1} parent=47 // pred_check_branch
          %302 = sbr.rel (%p300) target = $region56
        $region55: #{tpu_custom_call.1} parent=47 // pred_region
          %303 = dma.done [#allocation6], 256
        $region56: #{tpu_custom_call.1} parent=47 // pred_fallthru
          _
        // Predicated region
        $region57: #{tpu_custom_call.1} parent=47 // pred_check
          %p304 = pneg %p110
        $region58: #{tpu_custom_call.1} parent=47 // pred_check_branch
          %306 = sbr.rel (%p304) target = $region60
        $region59: #{tpu_custom_call.1} parent=47 // pred_region
          %307 = dma.done [#allocation6], 2048
        $region60: #{tpu_custom_call.1} parent=47 // pred_fallthru
          _
        // Predicated region
        $region61: #{tpu_custom_call.1} parent=47 // pred_check
          %p308 = pneg %p152
        $region62: #{tpu_custom_call.1} parent=47 // pred_check_branch
          %310 = sbr.rel (%p308) target = $region64
        $region63: #{tpu_custom_call.1} parent=47 // pred_region
          %311 = dma.done [#allocation9], 2048
        $region64: #{tpu_custom_call.1} parent=47 // pred_fallthru
          _
        %s312 = sand.u32 %s34, 1
        %s313 = scalar_lea.sflag [#allocation3], %s312
        %s314 = sand.u32 %s34, 1
        %s315 = smul.addr %s314, 8
        %s316 = scalar_lea.vmem [#allocation2], %s315
        %p317 = pneg %p47
        %p318 = pneg %p44
        %p319 = pneg %p68
        %p320 = pneg %p65
        %p321 = pneg %p89
        %p322 = pneg %p86
        %p323 = pneg %p110
        %p324 = pneg %p107
        %p325 = pneg %p131
        %p326 = pneg %p128
        %p327 = pneg %p152
        %p328 = pneg %p149
        %p329 = pneg %p173
        %p330 = pneg %p170
        %p331 = pneg %p199
        %p332 = pneg %p196
        %s333 = sand.u32 %s186, 1
        %s334 = scalar_lea.sflag [#allocation4], %s333
        %s335 = sand.u32 %s186, 1
        %s336 = smul.addr %s335, 8
        %s337 = scalar_lea.vmem [#allocation10], %s336
        %v338 = vld [vmem:[%s295] sm:$0xff]
        %v339 = vld [vmem:[#allocation5] sm:$0xff]
        %v340 = vld [vmem:[#allocation5 + $0x8] sm:$0xff]
        %v341 = vld [vmem:[%s2] sm:$0x1]
        %v343 = vlaneseq
        %v344 = vshrl.u32 %v343, 7
        %v345 = vsub.s32 0, %v344
        %v346 = vrot.slane %v341, %v345
        %vm348 = vcmask 130048
        %v350 = vsel %vm348, %v338, 0
        %352 = vmatprep.subr.mxu0 0.0
        %353 = vmatpush1.msra.mxu0 %v339
        %354 = vmatprep.subr.mxu0 0.0
        %355 = vmatpush1.msra.mxu0 %v340
        %356 = vmatprep.subr.mxu0 0.0
        %357 = vmatpush1.msra.mxu0 0.0
        %358 = vmatprep.subr.mxu0 0.0
        %359 = vmatpush1.msra.mxu0 0.0
        %360 = vmatprep.subr.mxu0 0.0
        %361 = vmatpush1.msra.mxu0 0.0
        %362 = vmatprep.subr.mxu0 0.0
        %363 = vmatpush1.msra.mxu0 0.0
        %364 = vmatprep.subr.mxu0 0.0
        %365 = vmatpush1.msra.mxu0 0.0
        %366 = vmatprep.subr.mxu0 0.0
        %367 = vmatpush1.msra.mxu0 0.0
        %368 = vmatprep.subr.mxu0 0.0
        %369 = vmatpush1.msra.mxu0 0.0
        %370 = vmatprep.subr.mxu0 0.0
        %371 = vmatpush1.msra.mxu0 0.0
        %372 = vmatprep.subr.mxu0 0.0
        %373 = vmatpush1.msra.mxu0 0.0
        %374 = vmatprep.subr.mxu0 0.0
        %375 = vmatpush1.msra.mxu0 0.0
        %376 = vmatprep.subr.mxu0 0.0
        %377 = vmatpush1.msra.mxu0 0.0
        %378 = vmatprep.subr.mxu0 0.0
        %379 = vmatpush1.msra.mxu0 0.0
        %380 = vmatprep.subr.mxu0 0.0
        %381 = vmatpush1.msra.mxu0 0.0
        %382 = vmatprep.subr.mxu0 0.0
        %383 = vmatpush1.msra.mxu0 0.0
        %384 = vmatprep.subr.mxu0 0.0
        %385 = vmatpush1.msra.mxu0 0.0
        %386 = vmatprep.subr.mxu0 0.0
        %387 = vmatpush1.msra.mxu0 0.0
        %388 = vmatprep.subr.mxu0 0.0
        %389 = vmatpush1.msra.mxu0 0.0
        %390 = vmatprep.subr.mxu0 0.0
        %391 = vmatpush1.msra.mxu0 0.0
        %392 = vmatprep.subr.mxu0 0.0
        %393 = vmatpush1.msra.mxu0 0.0
        %394 = vmatprep.subr.mxu0 0.0
        %395 = vmatpush1.msra.mxu0 0.0
        %396 = vmatprep.subr.mxu0 0.0
        %397 = vmatpush1.msra.mxu0 0.0
        %398 = vmatprep.subr.mxu0 0.0
        %399 = vmatpush1.msra.mxu0 0.0
        %400 = vmatprep.subr.mxu0 0.0
        %401 = vmatpush1.msra.mxu0 0.0
        %402 = vmatprep.subr.mxu0 0.0
        %403 = vmatpush1.msra.mxu0 0.0
        %404 = vmatprep.subr.mxu0 0.0
        %405 = vmatpush1.msra.mxu0 0.0
        %406 = vmatprep.subr.mxu0 0.0
        %407 = vmatpush1.msra.mxu0 0.0
        %408 = vmatprep.subr.mxu0 0.0
        %409 = vmatpush1.msra.mxu0 0.0
        %410 = vmatprep.subr.mxu0 0.0
        %411 = vmatpush1.msra.mxu0 0.0
        %412 = vmatprep.subr.mxu0 0.0
        %413 = vmatpush1.msra.mxu0 0.0
        %414 = vmatprep.subr.mxu0 0.0
        %415 = vmatpush1.msra.mxu0 0.0
        %416 = vmatprep.mubr.f32.mxu0 0.0
        %417 = vmatmul.mubr.f32.gmra.mrb[0].mxu0 %v350
        %v418 = vpop.f32.mrb[0].mxu0
        %v419 = vadd.f32 %v346, %v418
        %v420 = vpop.f32.mrb[0].mxu0
        %421 = vdwg.mxu0
        %v422 = vmax.f32 %v419, 0.0
        %v423 = vld [vmem:[#allocation7] sm:$0xff]
        %v424 = vld [vmem:[#allocation7 + $0x8] sm:$0xff]
        %v425 = vld [vmem:[#allocation7 + $0x10] sm:$0xff]
        %v426 = vld [vmem:[#allocation7 + $0x18] sm:$0xff]
        %v427 = vld [vmem:[#allocation7 + $0x20] sm:$0xff]
        %v428 = vld [vmem:[#allocation7 + $0x28] sm:$0xff]
        %v429 = vld [vmem:[#allocation7 + $0x30] sm:$0xff]
        %v430 = vld [vmem:[#allocation7 + $0x38] sm:$0xff]
        %v431 = vld [vmem:[#allocation7 + $0x40] sm:$0xff]
        %v432 = vld [vmem:[#allocation7 + $0x48] sm:$0xff]
        %v433 = vld [vmem:[#allocation7 + $0x50] sm:$0xff]
        %v434 = vld [vmem:[#allocation7 + $0x58] sm:$0xff]
        %v435 = vld [vmem:[#allocation7 + $0x60] sm:$0xff]
        %v436 = vld [vmem:[#allocation7 + $0x68] sm:$0xff]
        %v437 = vld [vmem:[#allocation7 + $0x70] sm:$0xff]
        %v438 = vld [vmem:[#allocation7 + $0x78] sm:$0xff]
        %v439 = vld [vmem:[%s4] sm:$0x1]
        %v441 = vlaneseq
        %v442 = vshrl.u32 %v441, 7
        %v443 = vsub.s32 0, %v442
        %v444 = vrot.slane %v439, %v443
        %446 = vmatprep.subr.mxu0 0.0
        %447 = vmatpush1.msra.mxu0 %v423
        %448 = vmatprep.subr.mxu0 0.0
        %449 = vmatpush1.msra.mxu0 %v424
        %450 = vmatprep.subr.mxu0 0.0
        %451 = vmatpush1.msra.mxu0 %v425
        %452 = vmatprep.subr.mxu0 0.0
        %453 = vmatpush1.msra.mxu0 %v426
        %454 = vmatprep.subr.mxu0 0.0
        %455 = vmatpush1.msra.mxu0 %v427
        %456 = vmatprep.subr.mxu0 0.0
        %457 = vmatpush1.msra.mxu0 %v428
        %458 = vmatprep.subr.mxu0 0.0
        %459 = vmatpush1.msra.mxu0 %v429
        %460 = vmatprep.subr.mxu0 0.0
        %461 = vmatpush1.msra.mxu0 %v430
        %462 = vmatprep.subr.mxu0 0.0
        %463 = vmatpush1.msra.mxu0 %v431
        %464 = vmatprep.subr.mxu0 0.0
        %465 = vmatpush1.msra.mxu0 %v432
        %466 = vmatprep.subr.mxu0 0.0
        %467 = vmatpush1.msra.mxu0 %v433
        %468 = vmatprep.subr.mxu0 0.0
        %469 = vmatpush1.msra.mxu0 %v434
        %470 = vmatprep.subr.mxu0 0.0
        %471 = vmatpush1.msra.mxu0 %v435
        %472 = vmatprep.subr.mxu0 0.0
        %473 = vmatpush1.msra.mxu0 %v436
        %474 = vmatprep.subr.mxu0 0.0
        %475 = vmatpush1.msra.mxu0 %v437
        %476 = vmatprep.subr.mxu0 0.0
        %477 = vmatpush1.msra.mxu0 %v438
        %478 = vmatprep.subr.mxu0 0.0
        %479 = vmatpush1.msra.mxu0 0.0
        %480 = vmatprep.subr.mxu0 0.0
        %481 = vmatpush1.msra.mxu0 0.0
        %482 = vmatprep.subr.mxu0 0.0
        %483 = vmatpush1.msra.mxu0 0.0
        %484 = vmatprep.subr.mxu0 0.0
        %485 = vmatpush1.msra.mxu0 0.0
        %486 = vmatprep.subr.mxu0 0.0
        %487 = vmatpush1.msra.mxu0 0.0
        %488 = vmatprep.subr.mxu0 0.0
        %489 = vmatpush1.msra.mxu0 0.0
        %490 = vmatprep.subr.mxu0 0.0
        %491 = vmatpush1.msra.mxu0 0.0
        %492 = vmatprep.subr.mxu0 0.0
        %493 = vmatpush1.msra.mxu0 0.0
        %494 = vmatprep.subr.mxu0 0.0
        %495 = vmatpush1.msra.mxu0 0.0
        %496 = vmatprep.subr.mxu0 0.0
        %497 = vmatpush1.msra.mxu0 0.0
        %498 = vmatprep.subr.mxu0 0.0
        %499 = vmatpush1.msra.mxu0 0.0
        %500 = vmatprep.subr.mxu0 0.0
        %501 = vmatpush1.msra.mxu0 0.0
        %502 = vmatprep.subr.mxu0 0.0
        %503 = vmatpush1.msra.mxu0 0.0
        %504 = vmatprep.subr.mxu0 0.0
        %505 = vmatpush1.msra.mxu0 0.0
        %506 = vmatprep.subr.mxu0 0.0
        %507 = vmatpush1.msra.mxu0 0.0
        %508 = vmatprep.subr.mxu0 0.0
        %509 = vmatpush1.msra.mxu0 0.0
        %510 = vmatprep.mubr.f32.mxu0 0.0
        %511 = vmatmul.mubr.f32.gmra.mrb[0].mxu0 %v422
        %v512 = vpop.f32.mrb[0].mxu0
        %v513 = vadd.f32 %v444, %v512
        %v514 = vpop.f32.mrb[0].mxu0
        %515 = vdwg.mxu0
        %v516 = vmax.f32 %v513, 0.0
        %v517 = vld [vmem:[#allocation8] sm:$0xff]
        %v518 = vld [vmem:[#allocation8 + $0x8] sm:$0xff]
        %v519 = vld [vmem:[#allocation8 + $0x10] sm:$0xff]
        %v520 = vld [vmem:[#allocation8 + $0x18] sm:$0xff]
        %v521 = vld [vmem:[#allocation8 + $0x20] sm:$0xff]
        %v522 = vld [vmem:[#allocation8 + $0x28] sm:$0xff]
        %v523 = vld [vmem:[#allocation8 + $0x30] sm:$0xff]
        %v524 = vld [vmem:[#allocation8 + $0x38] sm:$0xff]
        %v525 = vld [vmem:[#allocation8 + $0x40] sm:$0xff]
        %v526 = vld [vmem:[#allocation8 + $0x48] sm:$0xff]
        %v527 = vld [vmem:[#allocation8 + $0x50] sm:$0xff]
        %v528 = vld [vmem:[#allocation8 + $0x58] sm:$0xff]
        %v529 = vld [vmem:[#allocation8 + $0x60] sm:$0xff]
        %v530 = vld [vmem:[#allocation8 + $0x68] sm:$0xff]
        %v531 = vld [vmem:[#allocation8 + $0x70] sm:$0xff]
        %v532 = vld [vmem:[#allocation8 + $0x78] sm:$0xff]
        %v533 = vld [vmem:[%s6] sm:$0x1]
        %v535 = vlaneseq
        %v536 = vshrl.u32 %v535, 7
        %v537 = vsub.s32 0, %v536
        %v538 = vrot.slane %v533, %v537
        %540 = vmatprep.subr.mxu0 0.0
        %541 = vmatpush1.msra.mxu0 %v517
        %542 = vmatprep.subr.mxu0 0.0
        %543 = vmatpush1.msra.mxu0 %v518
        %544 = vmatprep.subr.mxu0 0.0
        %545 = vmatpush1.msra.mxu0 %v519
        %546 = vmatprep.subr.mxu0 0.0
        %547 = vmatpush1.msra.mxu0 %v520
        %548 = vmatprep.subr.mxu0 0.0
        %549 = vmatpush1.msra.mxu0 %v521
        %550 = vmatprep.subr.mxu0 0.0
        %551 = vmatpush1.msra.mxu0 %v522
        %552 = vmatprep.subr.mxu0 0.0
        %553 = vmatpush1.msra.mxu0 %v523
        %554 = vmatprep.subr.mxu0 0.0
        %555 = vmatpush1.msra.mxu0 %v524
        %556 = vmatprep.subr.mxu0 0.0
        %557 = vmatpush1.msra.mxu0 %v525
        %558 = vmatprep.subr.mxu0 0.0
        %559 = vmatpush1.msra.mxu0 %v526
        %560 = vmatprep.subr.mxu0 0.0
        %561 = vmatpush1.msra.mxu0 %v527
        %562 = vmatprep.subr.mxu0 0.0
        %563 = vmatpush1.msra.mxu0 %v528
        %564 = vmatprep.subr.mxu0 0.0
        %565 = vmatpush1.msra.mxu0 %v529
        %566 = vmatprep.subr.mxu0 0.0
        %567 = vmatpush1.msra.mxu0 %v530
        %568 = vmatprep.subr.mxu0 0.0
        %569 = vmatpush1.msra.mxu0 %v531
        %570 = vmatprep.subr.mxu0 0.0
        %571 = vmatpush1.msra.mxu0 %v532
        %572 = vmatprep.subr.mxu0 0.0
        %573 = vmatpush1.msra.mxu0 0.0
        %574 = vmatprep.subr.mxu0 0.0
        %575 = vmatpush1.msra.mxu0 0.0
        %576 = vmatprep.subr.mxu0 0.0
        %577 = vmatpush1.msra.mxu0 0.0
        %578 = vmatprep.subr.mxu0 0.0
        %579 = vmatpush1.msra.mxu0 0.0
        %580 = vmatprep.subr.mxu0 0.0
        %581 = vmatpush1.msra.mxu0 0.0
        %582 = vmatprep.subr.mxu0 0.0
        %583 = vmatpush1.msra.mxu0 0.0
        %584 = vmatprep.subr.mxu0 0.0
        %585 = vmatpush1.msra.mxu0 0.0
        %586 = vmatprep.subr.mxu0 0.0
        %587 = vmatpush1.msra.mxu0 0.0
        %588 = vmatprep.subr.mxu0 0.0
        %589 = vmatpush1.msra.mxu0 0.0
        %590 = vmatprep.subr.mxu0 0.0
        %591 = vmatpush1.msra.mxu0 0.0
        %592 = vmatprep.subr.mxu0 0.0
        %593 = vmatpush1.msra.mxu0 0.0
        %594 = vmatprep.subr.mxu0 0.0
        %595 = vmatpush1.msra.mxu0 0.0
        %596 = vmatprep.subr.mxu0 0.0
        %597 = vmatpush1.msra.mxu0 0.0
        %598 = vmatprep.subr.mxu0 0.0
        %599 = vmatpush1.msra.mxu0 0.0
        %600 = vmatprep.subr.mxu0 0.0
        %601 = vmatpush1.msra.mxu0 0.0
        %602 = vmatprep.subr.mxu0 0.0
        %603 = vmatpush1.msra.mxu0 0.0
        %604 = vmatprep.mubr.f32.mxu0 0.0
        %605 = vmatmul.mubr.f32.gmra.mrb[0].mxu0 %v516
        %v606 = vpop.f32.mrb[0].mxu0
        %v607 = vadd.f32 %v538, %v606
        %v608 = vpop.f32.mrb[0].mxu0
        %609 = vdwg.mxu0
        %610 = vst [vmem:[%s337] sm:$0xff] %v607
        %s611 = sand.u32 %s186, 1
        %s612 = scalar_lea.sflag [#allocation4], %s611
        %s613 = sand.u32 %s186, 1
        %s614 = smul.addr %s613, 8
        %s615 = scalar_lea.vmem [#allocation10], %s614
        // Predicated region
        $region65: #{tpu_custom_call.1} parent=47 // pred_check
          %p616 = pneg %p196
        $region66: #{tpu_custom_call.1} parent=47 // pred_check_branch
          %618 = sbr.rel (%p616) target = $region68
        $region67: #{tpu_custom_call.1} parent=47 // pred_region
          %s620 = ssub.s32 128, 128
          %621 = vsyncadd %s612, %s620
          %s622 = smul.addr %s26, 128
          %s623 = scalar_lea.hbm %s7, %s622
          %s625 = sshll.u32 %s615, 4
          %s626 = int_to_ptr.vmem [resolvable:$true] %s625
          %628 = dma.vmem_to_hbm [thread:$0]  %s626, 128, %s623, %s612
        $region68: #{tpu_custom_call.1} parent=47 // pred_fallthru
          _
      $region48: #{tpu_custom_call.1} parent=5 // pred_fallthru
        _
      %p629 = scmp.le.s32.totalorder 2, %s21
      // Predicated region
      $region69: #{tpu_custom_call.1} parent=5 // pred_check
        %p630 = pneg %p629
      $region70: #{tpu_custom_call.1} parent=5 // pred_check_branch
        %632 = sbr.rel (%p630) target = $region72
      $region71: #{tpu_custom_call.1} parent=5 // pred_region
        %s633 = ssub.s32 %s21, 2
        // Predicated region
        $region73: #{tpu_custom_call.1} parent=71 // pred_check
          %p634 = pneg %p202
        $region74: #{tpu_custom_call.1} parent=71 // pred_check_branch
          %636 = sbr.rel (%p634) target = $region76
        $region75: #{tpu_custom_call.1} parent=71 // pred_region
          %s637 = sand.u32 %s187, 1
          %s638 = scalar_lea.sflag [#allocation4], %s637
          %s639 = sand.u32 %s187, 1
          %s640 = smul.addr %s639, 8
          %s641 = scalar_lea.vmem [#allocation10], %s640
          %642 = dma.done %s638, 128
        $region76: #{tpu_custom_call.1} parent=71 // pred_fallthru
          _
      $region72: #{tpu_custom_call.1} parent=5 // pred_fallthru
        _
    $region6: #{tpu_custom_call.1} parent=1 // loop_footer
      %s25 = sadd.s32 1, %s21
    $region7: #{tpu_custom_call.1} parent=1 // loop_footer_branch
      %20 = sbr.rel target = $region3
    $region8: #{tpu_custom_call.1} parent=1 // loop_exit
      _
    %643 = vsyncpa [#allocation3], 1
    %s644 = scalar_lea.sflag [#allocation3], 1
    %645 = vsyncpa %s644, 1
    %646 = vsyncpa [#allocation6], 1
    %647 = vsyncpa [#allocation9], 1
    %648 = vsyncpa [#allocation4], 1
    %s649 = scalar_lea.sflag [#allocation4], 1
    %650 = vsyncpa %s649, 1

// kernel: tpu_custom_call.1
$region0: #{tpu_custom_call.1}
  #allocation0 [shape = 'u32[]', space=smem, size = 0x4, offset = 0x4, fixed_abs, tag = 'smem constant byte address 0x4 - core index']
  #allocation1 [shape = 'u32[144,128]{1,0:T(1,128)}', space=vmem, size = 0x12000, scoped, tag = 'internal scratch']
  %s0 = inlined_call_operand.hbm [shape: f32[16,16], index: 0, kind: input, shape index: {}]
  %s1 = inlined_call_operand.hbm [shape: f32[16,128], index: 1, kind: input, shape index: {}]
  %s2 = inlined_call_operand.vmem [shape: f32[1,128], index: 2, kind: input, shape index: {}]
  %s3 = inlined_call_operand.hbm [shape: f32[128,128], index: 3, kind: input, shape index: {}]
  %s4 = inlined_call_operand.vmem [shape: f32[1,128], index: 4, kind: input, shape index: {}]
  %s5 = inlined_call_operand.hbm [shape: f32[128,128], index: 5, kind: input, shape index: {}]
  %s6 = inlined_call_operand.vmem [shape: f32[1,128], index: 6, kind: input, shape index: {}]
  %s7 = inlined_call_operand.hbm [shape: f32[16,128], index: 7, kind: output, shape index: {}]
  %s8 = sld [smem:[#allocation0]]
  $region77: #{tpu_custom_call.1} parent=0
    _
  %s10 = ssub.s32 1, %s8
  %s11 = scalar_select 0, %s10, %s8
  $region1: #{tpu_custom_call.1} parent=0
    #allocation2 [shape = 'u8[8192]{0}', space=vmem, size = 0x2000, scoped, tag = 'input window, operand 0']
    #allocation3 [shape = 's32[2]{0}', space=sflag, size = 0x8, scoped, tag = 'scoped memory for tpu_custom_call.1']
    #allocation4 [shape = 's32[2]{0}', space=sflag, size = 0x8, scoped, tag = 'scoped memory for tpu_custom_call.1']
    #allocation5 [shape = 'u8[8192]{0}', space=vmem, size = 0x2000, scoped, tag = 'input window, operand 1, single buffered']
    #allocation6 [shape = 's32[1]{0}', space=sflag, size = 0x4, scoped, tag = 'scoped memory for tpu_custom_call.1']
    #allocation7 [shape = 'u8[65536]{0}', space=vmem, size = 0x10000, scoped, tag = 'input window, operand 3, single buffered']
    #allocation8 [shape = 'u8[65536]{0}', space=vmem, size = 0x10000, scoped, tag = 'input window, operand 5, single buffered']
    #allocation9 [shape = 's32[1]{0}', space=sflag, size = 0x4, scoped, tag = 'scoped memory for tpu_custom_call.1']
    #allocation10 [shape = 'u8[8192]{0}', space=vmem, size = 0x2000, scoped, tag = 'output window, operand 0']
    %12 = vsyncpa [#allocation3], 0
    %s13 = scalar_lea.sflag [#allocation3], 1
    %14 = vsyncpa %s13, 0
    %15 = vsyncpa [#allocation6], 0
    %16 = vsyncpa [#allocation9], 0
    %17 = vsyncpa [#allocation4], 0
    %s18 = scalar_lea.sflag [#allocation4], 1
    %19 = vsyncpa %s18, 0
    loop: start=0, step=1, limit=4
    $region2: #{tpu_custom_call.1} parent=1 // loop_pre_header
      _
    $region3: #{tpu_custom_call.1} parent=1 // loop_header
      %s21 = sphi 0, %s25
      %p22 = scmp.ge.s32.totalorder %s21, 4
      %s31 = sphi 0, %s33
      %s34 = sphi 0, %s31
      %s35 = sphi 0, %s34
      %s51 = sphi 0, %s35
      %s55 = sphi 0, %s55
      %s57 = sphi 0, %s55
      %s58 = sphi 0, %s57
      %s72 = sphi 0, %s58
      %s76 = sphi 0, %s76
      %s78 = sphi 0, %s76
      %s79 = sphi 0, %s78
      %s93 = sphi 0, %s79
      %s97 = sphi 0, %s97
      %s99 = sphi 0, %s97
      %s100 = sphi 0, %s99
      %s114 = sphi 0, %s100
      %s118 = sphi 0, %s118
      %s120 = sphi 0, %s118
      %s121 = sphi 0, %s120
      %s135 = sphi 0, %s121
      %s139 = sphi 0, %s139
      %s141 = sphi 0, %s139
      %s142 = sphi 0, %s141
      %s156 = sphi 0, %s142
      %s160 = sphi 0, %s160
      %s162 = sphi 0, %s160
      %s163 = sphi 0, %s162
      %s177 = sphi 0, %s163
      %s183 = sphi 0, %s185
      %s186 = sphi 0, %s183
      %s187 = sphi 0, %s186
      %s203 = sphi 0, %s187
    $region4: #{tpu_custom_call.1} parent=1 // loop_header_branch
      %24 = sbr.rel (%p22) target = $region8
    $region5: #{tpu_custom_call.1} parent=1 // loop_body
      %s26 = ssub.s32 %s21, 1
      %s27 = ssub.s32 %s21, 2
      %s28 = sadd.s32 %s21, 1
      %s29 = ssub.s32 %s21, %s28
      %p30 = scmp.eq.s32.totalorder %s29, 0
      %s32 = sadd.s32 %s31, 1
      %s33 = scalar_select %p30, %s31, %s32
      %p36 = pneg %p30
      %p37 = scmp.eq.s32.totalorder %s21, 1
      %p38 = por %p36, %p37
      %p39 = scmp.ne.s32.totalorder %s31, %s34
      %p40 = scmp.eq.s32.totalorder %s21, 0
      %p41 = por %p39, %p40
      %p42 = scmp.ne.s32.totalorder %s31, %s34
      %p43 = scmp.eq.s32.totalorder %s26, 1
      %p44 = por %p42, %p43
      %p45 = scmp.ne.s32.totalorder %s34, %s35
      %p46 = scmp.eq.s32.totalorder %s26, 0
      %p47 = por %p45, %p46
      %p48 = scmp.ne.s32.totalorder %s34, %s35
      %p49 = scmp.eq.s32.totalorder %s27, 1
      %p50 = por %p48, %p49
      %p52 = scmp.ne.s32.totalorder %s35, %s51
      %p53 = scmp.eq.s32.totalorder %s27, 0
      %p54 = por %p52, %p53
      %s56 = sadd.s32 %s55, 1
      %p59 = scmp.eq.s32.totalorder %s21, 1
      %p60 = scmp.ne.s32.totalorder %s55, %s57
      %p61 = scmp.eq.s32.totalorder %s21, 0
      %p62 = por %p60, %p61
      %p63 = scmp.ne.s32.totalorder %s55, %s57
      %p64 = scmp.eq.s32.totalorder %s26, 1
      %p65 = por %p63, %p64
      %p66 = scmp.ne.s32.totalorder %s57, %s58
      %p67 = scmp.eq.s32.totalorder %s26, 0
      %p68 = por %p66, %p67
      %p69 = scmp.ne.s32.totalorder %s57, %s58
      %p70 = scmp.eq.s32.totalorder %s27, 1
      %p71 = por %p69, %p70
      %p73 = scmp.ne.s32.totalorder %s58, %s72
      %p74 = scmp.eq.s32.totalorder %s27, 0
      %p75 = por %p73, %p74
      %s77 = sadd.s32 %s76, 1
      %p80 = scmp.eq.s32.totalorder %s21, 1
      %p81 = scmp.ne.s32.totalorder %s76, %s78
      %p82 = scmp.eq.s32.totalorder %s21, 0
      %p83 = por %p81, %p82
      %p84 = scmp.ne.s32.totalorder %s76, %s78
      %p85 = scmp.eq.s32.totalorder %s26, 1
      %p86 = por %p84, %p85
      %p87 = scmp.ne.s32.totalorder %s78, %s79
      %p88 = scmp.eq.s32.totalorder %s26, 0
      %p89 = por %p87, %p88
      %p90 = scmp.ne.s32.totalorder %s78, %s79
      %p91 = scmp.eq.s32.totalorder %s27, 1
      %p92 = por %p90, %p91
      %p94 = scmp.ne.s32.totalorder %s79, %s93
      %p95 = scmp.eq.s32.totalorder %s27, 0
      %p96 = por %p94, %p95
      %s98 = sadd.s32 %s97, 1
      %p101 = scmp.eq.s32.totalorder %s21, 1
      %p102 = scmp.ne.s32.totalorder %s97, %s99
      %p103 = scmp.eq.s32.totalorder %s21, 0
      %p104 = por %p102, %p103
      %p105 = scmp.ne.s32.totalorder %s97, %s99
      %p106 = scmp.eq.s32.totalorder %s26, 1
      %p107 = por %p105, %p106
      %p108 = scmp.ne.s32.totalorder %s99, %s100
      %p109 = scmp.eq.s32.totalorder %s26, 0
      %p110 = por %p108, %p109
      %p111 = scmp.ne.s32.totalorder %s99, %s100
      %p112 = scmp.eq.s32.totalorder %s27, 1
      %p113 = por %p111, %p112
      %p115 = scmp.ne.s32.totalorder %s100, %s114
      %p116 = scmp.eq.s32.totalorder %s27, 0
      %p117 = por %p115, %p116
      %s119 = sadd.s32 %s118, 1
      %p122 = scmp.eq.s32.totalorder %s21, 1
      %p123 = scmp.ne.s32.totalorder %s118, %s120
      %p124 = scmp.eq.s32.totalorder %s21, 0
      %p125 = por %p123, %p124
      %p126 = scmp.ne.s32.totalorder %s118, %s120
      %p127 = scmp.eq.s32.totalorder %s26, 1
      %p128 = por %p126, %p127
      %p129 = scmp.ne.s32.totalorder %s120, %s121
      %p130 = scmp.eq.s32.totalorder %s26, 0
      %p131 = por %p129, %p130
      %p132 = scmp.ne.s32.totalorder %s120, %s121
      %p133 = scmp.eq.s32.totalorder %s27, 1
      %p134 = por %p132, %p133
      %p136 = scmp.ne.s32.totalorder %s121, %s135
      %p137 = scmp.eq.s32.totalorder %s27, 0
      %p138 = por %p136, %p137
      %s140 = sadd.s32 %s139, 1
      %p143 = scmp.eq.s32.totalorder %s21, 1
      %p144 = scmp.ne.s32.totalorder %s139, %s141
      %p145 = scmp.eq.s32.totalorder %s21, 0
      %p146 = por %p144, %p145
      %p147 = scmp.ne.s32.totalorder %s139, %s141
      %p148 = scmp.eq.s32.totalorder %s26, 1
      %p149 = por %p147, %p148
      %p150 = scmp.ne.s32.totalorder %s141, %s142
      %p151 = scmp.eq.s32.totalorder %s26, 0
      %p152 = por %p150, %p151
      %p153 = scmp.ne.s32.totalorder %s141, %s142
      %p154 = scmp.eq.s32.totalorder %s27, 1
      %p155 = por %p153, %p154
      %p157 = scmp.ne.s32.totalorder %s142, %s156
      %p158 = scmp.eq.s32.totalorder %s27, 0
      %p159 = por %p157, %p158
      %s161 = sadd.s32 %s160, 1
      %p164 = scmp.eq.s32.totalorder %s21, 1
      %p165 = scmp.ne.s32.totalorder %s160, %s162
      %p166 = scmp.eq.s32.totalorder %s21, 0
      %p167 = por %p165, %p166
      %p168 = scmp.ne.s32.totalorder %s160, %s162
      %p169 = scmp.eq.s32.totalorder %s26, 1
      %p170 = por %p168, %p169
      %p171 = scmp.ne.s32.totalorder %s162, %s163
      %p172 = scmp.eq.s32.totalorder %s26, 0
      %p173 = por %p171, %p172
      %p174 = scmp.ne.s32.totalorder %s162, %s163
      %p175 = scmp.eq.s32.totalorder %s27, 1
      %p176 = por %p174, %p175
      %p178 = scmp.ne.s32.totalorder %s163, %s177
      %p179 = scmp.eq.s32.totalorder %s27, 0
      %p180 = por %p178, %p179
      %s181 = ssub.s32 %s21, %s28
      %p182 = scmp.eq.s32.totalorder %s181, 0
      %s184 = sadd.s32 %s183, 1
      %s185 = scalar_select %p182, %s183, %s184
      %p188 = pneg %p182
      %p189 = scmp.eq.s32.totalorder %s21, 1
      %p190 = por %p188, %p189
      %p191 = scmp.ne.s32.totalorder %s183, %s186
      %p192 = scmp.eq.s32.totalorder %s21, 0
      %p193 = por %p191, %p192
      %p194 = scmp.ne.s32.totalorder %s183, %s186
      %p195 = scmp.eq.s32.totalorder %s26, 1
      %p196 = por %p194, %p195
      %p197 = scmp.ne.s32.totalorder %s186, %s187
      %p198 = scmp.eq.s32.totalorder %s26, 0
      %p199 = por %p197, %p198
      %p200 = scmp.ne.s32.totalorder %s186, %s187
      %p201 = scmp.eq.s32.totalorder %s27, 1
      %p202 = por %p200, %p201
      %p204 = scmp.ne.s32.totalorder %s187, %s203
      %p205 = scmp.eq.s32.totalorder %s27, 0
      %p206 = por %p204, %p205
      %p207 = scmp.le.s32.totalorder 1, %s21
      %p208 = scmp.lt.s32.totalorder %s21, 3
      %p209 = pnand %p207, %p208
      %p210 = pneg %p209
      // Predicated region
      $region9: #{tpu_custom_call.1} parent=5 // pred_check
        _
      $region10: #{tpu_custom_call.1} parent=5 // pred_check_branch
        %212 = sbr.rel (%p209) target = $region12
      $region11: #{tpu_custom_call.1} parent=5 // pred_region
        %s213 = ssub.s32 %s21, 1
        // Predicated region
        $region13: #{tpu_custom_call.1} parent=11 // pred_check
          %p214 = pneg %p68
        $region14: #{tpu_custom_call.1} parent=11 // pred_check_branch
          %216 = sbr.rel (%p214) target = $region16
        $region15: #{tpu_custom_call.1} parent=11 // pred_region
          %s218 = ssub.s32 256, 256
          %219 = vsyncadd [#allocation6], %s218
          %s220 = sshll.u32 [#allocation5], 4
          %s221 = int_to_ptr.vmem [resolvable:$true] %s220
          %226 = dma.hbm_to_vmem [thread:$0]  %s1, 256, %s221, [#allocation6], 128, 128, 8
        $region16: #{tpu_custom_call.1} parent=11 // pred_fallthru
          _
        // Predicated region
        $region17: #{tpu_custom_call.1} parent=11 // pred_check
          %p227 = pneg %p89
        $region18: #{tpu_custom_call.1} parent=11 // pred_check_branch
          %229 = sbr.rel (%p227) target = $region20
        $region19: #{tpu_custom_call.1} parent=11 // pred_region
          _
        $region20: #{tpu_custom_call.1} parent=11 // pred_fallthru
          _
        // Predicated region
        $region21: #{tpu_custom_call.1} parent=11 // pred_check
          %p230 = pneg %p110
        $region22: #{tpu_custom_call.1} parent=11 // pred_check_branch
          %232 = sbr.rel (%p230) target = $region24
        $region23: #{tpu_custom_call.1} parent=11 // pred_region
          %s234 = ssub.s32 2048, 2048
          %235 = vsyncadd [#allocation6], %s234
          %s236 = sshll.u32 [#allocation7], 4
          %s237 = int_to_ptr.vmem [resolvable:$true] %s236
          %242 = dma.hbm_to_vmem [thread:$0]  %s3, 2048, %s237, [#allocation6], 128, 128, 8
        $region24: #{tpu_custom_call.1} parent=11 // pred_fallthru
          _
        // Predicated region
        $region25: #{tpu_custom_call.1} parent=11 // pred_check
          %p243 = pneg %p131
        $region26: #{tpu_custom_call.1} parent=11 // pred_check_branch
          %245 = sbr.rel (%p243) target = $region28
        $region27: #{tpu_custom_call.1} parent=11 // pred_region
          _
        $region28: #{tpu_custom_call.1} parent=11 // pred_fallthru
          _
        // Predicated region
        $region29: #{tpu_custom_call.1} parent=11 // pred_check
          %p246 = pneg %p152
        $region30: #{tpu_custom_call.1} parent=11 // pred_check_branch
          %248 = sbr.rel (%p246) target = $region32
        $region31: #{tpu_custom_call.1} parent=11 // pred_region
          %s250 = ssub.s32 2048, 2048
          %251 = vsyncadd [#allocation9], %s250
          %s252 = sshll.u32 [#allocation8], 4
          %s253 = int_to_ptr.vmem [resolvable:$true] %s252
          %258 = dma.hbm_to_vmem [thread:$0]  %s5, 2048, %s253, [#allocation9], 128, 128, 8
        $region32: #{tpu_custom_call.1} parent=11 // pred_fallthru
          _
        // Predicated region
        $region33: #{tpu_custom_call.1} parent=11 // pred_check
          %p259 = pneg %p173
        $region34: #{tpu_custom_call.1} parent=11 // pred_check_branch
          %261 = sbr.rel (%p259) target = $region36
        $region35: #{tpu_custom_call.1} parent=11 // pred_region
          _
        $region36: #{tpu_custom_call.1} parent=11 // pred_fallthru
          _
      $region12: #{tpu_custom_call.1} parent=5 // pred_fallthru
        _
      %p262 = scmp.lt.s32.totalorder %s21, 2
      // Predicated region
      $region37: #{tpu_custom_call.1} parent=5 // pred_check
        %p263 = pneg %p262
      $region38: #{tpu_custom_call.1} parent=5 // pred_check_branch
        %265 = sbr.rel (%p263) target = $region40
      $region39: #{tpu_custom_call.1} parent=5 // pred_region
        // Predicated region
        $region41: #{tpu_custom_call.1} parent=39 // pred_check
          %p266 = pneg %p41
        $region42: #{tpu_custom_call.1} parent=39 // pred_check_branch
          %268 = sbr.rel (%p266) target = $region44
        $region43: #{tpu_custom_call.1} parent=39 // pred_region
          %s269 = sand.u32 %s31, 1
          %s270 = scalar_lea.sflag [#allocation3], %s269
          %s271 = sand.u32 %s31, 1
          %s272 = smul.addr %s271, 8
          %s273 = scalar_lea.vmem [#allocation2], %s272
          %s275 = ssub.s32 128, 128
          %276 = vsyncadd %s270, %s275
          %s277 = smul.addr %s21, 128
          %s278 = scalar_lea.hbm %s0, %s277
          %s280 = sshll.u32 %s273, 4
          %s281 = int_to_ptr.vmem [resolvable:$true] %s280
          %283 = dma.hbm_to_vmem [thread:$0]  %s278, 128, %s281, %s270
        $region44: #{tpu_custom_call.1} parent=39 // pred_fallthru
          _
      $region40: #{tpu_custom_call.1} parent=5 // pred_fallthru
        _
      %p284 = scmp.le.s32.totalorder 1, %s21
      %p285 = scmp.lt.s32.totalorder %s21, 3
      %p286 = pnand %p284, %p285
      %p287 = pneg %p286
      // Predicated region
      $region45: #{tpu_custom_call.1} parent=5 // pred_check
        _
      $region46: #{tpu_custom_call.1} parent=5 // pred_check_branch
        %289 = sbr.rel (%p286) target = $region48
      $region47: #{tpu_custom_call.1} parent=5 // pred_region
        %s290 = ssub.s32 %s21, 1
        %s291 = sand.u32 %s34, 1
        %s292 = scalar_lea.sflag [#allocation3], %s291
        %s293 = sand.u32 %s34, 1
        %s294 = smul.addr %s293, 8
        %s295 = scalar_lea.vmem [#allocation2], %s294
        // Predicated region
        $region49: #{tpu_custom_call.1} parent=47 // pred_check
          %p296 = pneg %p47
        $region50: #{tpu_custom_call.1} parent=47 // pred_check_branch
          %298 = sbr.rel (%p296) target = $region52
        $region51: #{tpu_custom_call.1} parent=47 // pred_region
          %299 = dma.done %s292, 128
        $region52: #{tpu_custom_call.1} parent=47 // pred_fallthru
          _
        // Predicated region
        $region53: #{tpu_custom_call.1} parent=47 // pred_check
          %p300 = pneg %p68
        $region54: #{tpu_custom_call.1} parent=47 // pred_check_branch
          %302 = sbr.rel (%p300) target = $region56
        $region55: #{tpu_custom_call.1} parent=47 // pred_region
          %303 = dma.done [#allocation6], 256
        $region56: #{tpu_custom_call.1} parent=47 // pred_fallthru
          _
        // Predicated region
        $region57: #{tpu_custom_call.1} parent=47 // pred_check
          %p304 = pneg %p110
        $region58: #{tpu_custom_call.1} parent=47 // pred_check_branch
          %306 = sbr.rel (%p304) target = $region60
        $region59: #{tpu_custom_call.1} parent=47 // pred_region
          %307 = dma.done [#allocation6], 2048
        $region60: #{tpu_custom_call.1} parent=47 // pred_fallthru
          _
        // Predicated region
        $region61: #{tpu_custom_call.1} parent=47 // pred_check
          %p308 = pneg %p152
        $region62: #{tpu_custom_call.1} parent=47 // pred_check_branch
          %310 = sbr.rel (%p308) target = $region64
        $region63: #{tpu_custom_call.1} parent=47 // pred_region
          %311 = dma.done [#allocation9], 2048
        $region64: #{tpu_custom_call.1} parent=47 // pred_fallthru
          _
        %s312 = sand.u32 %s34, 1
        %s313 = scalar_lea.sflag [#allocation3], %s312
        %s314 = sand.u32 %s34, 1
        %s315 = smul.addr %s314, 8
        %s316 = scalar_lea.vmem [#allocation2], %s315
        %p317 = pneg %p47
        %p318 = pneg %p44
        %p319 = pneg %p68
        %p320 = pneg %p65
        %p321 = pneg %p89
        %p322 = pneg %p86
        %p323 = pneg %p110
        %p324 = pneg %p107
        %p325 = pneg %p131
        %p326 = pneg %p128
        %p327 = pneg %p152
        %p328 = pneg %p149
        %p329 = pneg %p173
        %p330 = pneg %p170
        %p331 = pneg %p199
        %p332 = pneg %p196
        %s333 = sand.u32 %s186, 1
        %s334 = scalar_lea.sflag [#allocation4], %s333
        %s335 = sand.u32 %s186, 1
        %s336 = smul.addr %s335, 8
        %s337 = scalar_lea.vmem [#allocation10], %s336
        %v338 = vld [vmem:[%s295] sm:$0xff]
        %v339 = vld [vmem:[#allocation5] sm:$0xff]
        %v340 = vld [vmem:[#allocation5 + $0x8] sm:$0xff]
        %v341 = vld [vmem:[%s2] sm:$0x1]
        %v343 = vlaneseq
        %v344 = vshrl.u32 %v343, 7
        %v345 = vsub.s32 0, %v344
        %v346 = vrot.slane %v341, %v345
        %vm348 = vcmask 130048
        %v350 = vsel %vm348, %v338, 0
        %352 = vmatprep.subr.mxu0 0.0
        %353 = vmatpush1.msra.mxu0 %v339
        %354 = vmatprep.subr.mxu0 0.0
        %355 = vmatpush1.msra.mxu0 %v340
        %356 = vmatprep.subr.mxu0 0.0
        %357 = vmatpush1.msra.mxu0 0.0
        %358 = vmatprep.subr.mxu0 0.0
        %359 = vmatpush1.msra.mxu0 0.0
        %360 = vmatprep.subr.mxu0 0.0
        %361 = vmatpush1.msra.mxu0 0.0
        %362 = vmatprep.subr.mxu0 0.0
        %363 = vmatpush1.msra.mxu0 0.0
        %364 = vmatprep.subr.mxu0 0.0
        %365 = vmatpush1.msra.mxu0 0.0
        %366 = vmatprep.subr.mxu0 0.0
        %367 = vmatpush1.msra.mxu0 0.0
        %368 = vmatprep.subr.mxu0 0.0
        %369 = vmatpush1.msra.mxu0 0.0
        %370 = vmatprep.subr.mxu0 0.0
        %371 = vmatpush1.msra.mxu0 0.0
        %372 = vmatprep.subr.mxu0 0.0
        %373 = vmatpush1.msra.mxu0 0.0
        %374 = vmatprep.subr.mxu0 0.0
        %375 = vmatpush1.msra.mxu0 0.0
        %376 = vmatprep.subr.mxu0 0.0
        %377 = vmatpush1.msra.mxu0 0.0
        %378 = vmatprep.subr.mxu0 0.0
        %379 = vmatpush1.msra.mxu0 0.0
        %380 = vmatprep.subr.mxu0 0.0
        %381 = vmatpush1.msra.mxu0 0.0
        %382 = vmatprep.subr.mxu0 0.0
        %383 = vmatpush1.msra.mxu0 0.0
        %384 = vmatprep.subr.mxu0 0.0
        %385 = vmatpush1.msra.mxu0 0.0
        %386 = vmatprep.subr.mxu0 0.0
        %387 = vmatpush1.msra.mxu0 0.0
        %388 = vmatprep.subr.mxu0 0.0
        %389 = vmatpush1.msra.mxu0 0.0
        %390 = vmatprep.subr.mxu0 0.0
        %391 = vmatpush1.msra.mxu0 0.0
        %392 = vmatprep.subr.mxu0 0.0
        %393 = vmatpush1.msra.mxu0 0.0
        %394 = vmatprep.subr.mxu0 0.0
        %395 = vmatpush1.msra.mxu0 0.0
        %396 = vmatprep.subr.mxu0 0.0
        %397 = vmatpush1.msra.mxu0 0.0
        %398 = vmatprep.subr.mxu0 0.0
        %399 = vmatpush1.msra.mxu0 0.0
        %400 = vmatprep.subr.mxu0 0.0
        %401 = vmatpush1.msra.mxu0 0.0
        %402 = vmatprep.subr.mxu0 0.0
        %403 = vmatpush1.msra.mxu0 0.0
        %404 = vmatprep.subr.mxu0 0.0
        %405 = vmatpush1.msra.mxu0 0.0
        %406 = vmatprep.subr.mxu0 0.0
        %407 = vmatpush1.msra.mxu0 0.0
        %408 = vmatprep.subr.mxu0 0.0
        %409 = vmatpush1.msra.mxu0 0.0
        %410 = vmatprep.subr.mxu0 0.0
        %411 = vmatpush1.msra.mxu0 0.0
        %412 = vmatprep.subr.mxu0 0.0
        %413 = vmatpush1.msra.mxu0 0.0
        %414 = vmatprep.subr.mxu0 0.0
        %415 = vmatpush1.msra.mxu0 0.0
        %416 = vmatprep.mubr.f32.mxu0 0.0
        %417 = vmatmul.mubr.f32.gmra.mrb[0].mxu0 %v350
        %v418 = vpop.f32.mrb[0].mxu0
        %v419 = vadd.f32 %v346, %v418
        %v420 = vpop.f32.mrb[0].mxu0
        %421 = vdwg.mxu0
        %v422 = vmax.f32 %v419, 0.0
        %v423 = vld [vmem:[#allocation7] sm:$0xff]
        %v424 = vld [vmem:[#allocation7 + $0x8] sm:$0xff]
        %v425 = vld [vmem:[#allocation7 + $0x10] sm:$0xff]
        %v426 = vld [vmem:[#allocation7 + $0x18] sm:$0xff]
        %v427 = vld [vmem:[#allocation7 + $0x20] sm:$0xff]
        %v428 = vld [vmem:[#allocation7 + $0x28] sm:$0xff]
        %v429 = vld [vmem:[#allocation7 + $0x30] sm:$0xff]
        %v430 = vld [vmem:[#allocation7 + $0x38] sm:$0xff]
        %v431 = vld [vmem:[#allocation7 + $0x40] sm:$0xff]
        %v432 = vld [vmem:[#allocation7 + $0x48] sm:$0xff]
        %v433 = vld [vmem:[#allocation7 + $0x50] sm:$0xff]
        %v434 = vld [vmem:[#allocation7 + $0x58] sm:$0xff]
        %v435 = vld [vmem:[#allocation7 + $0x60] sm:$0xff]
        %v436 = vld [vmem:[#allocation7 + $0x68] sm:$0xff]
        %v437 = vld [vmem:[#allocation7 + $0x70] sm:$0xff]
        %v438 = vld [vmem:[#allocation7 + $0x78] sm:$0xff]
        %v439 = vld [vmem:[%s4] sm:$0x1]
        %v441 = vlaneseq
        %v442 = vshrl.u32 %v441, 7
        %v443 = vsub.s32 0, %v442
        %v444 = vrot.slane %v439, %v443
        %446 = vmatprep.subr.mxu0 0.0
        %447 = vmatpush1.msra.mxu0 %v423
        %448 = vmatprep.subr.mxu0 0.0
        %449 = vmatpush1.msra.mxu0 %v424
        %450 = vmatprep.subr.mxu0 0.0
        %451 = vmatpush1.msra.mxu0 %v425
        %452 = vmatprep.subr.mxu0 0.0
        %453 = vmatpush1.msra.mxu0 %v426
        %454 = vmatprep.subr.mxu0 0.0
        %455 = vmatpush1.msra.mxu0 %v427
        %456 = vmatprep.subr.mxu0 0.0
        %457 = vmatpush1.msra.mxu0 %v428
        %458 = vmatprep.subr.mxu0 0.0
        %459 = vmatpush1.msra.mxu0 %v429
        %460 = vmatprep.subr.mxu0 0.0
        %461 = vmatpush1.msra.mxu0 %v430
        %462 = vmatprep.subr.mxu0 0.0
        %463 = vmatpush1.msra.mxu0 %v431
        %464 = vmatprep.subr.mxu0 0.0
        %465 = vmatpush1.msra.mxu0 %v432
        %466 = vmatprep.subr.mxu0 0.0
        %467 = vmatpush1.msra.mxu0 %v433
        %468 = vmatprep.subr.mxu0 0.0
        %469 = vmatpush1.msra.mxu0 %v434
        %470 = vmatprep.subr.mxu0 0.0
        %471 = vmatpush1.msra.mxu0 %v435
        %472 = vmatprep.subr.mxu0 0.0
        %473 = vmatpush1.msra.mxu0 %v436
        %474 = vmatprep.subr.mxu0 0.0
        %475 = vmatpush1.msra.mxu0 %v437
        %476 = vmatprep.subr.mxu0 0.0
        %477 = vmatpush1.msra.mxu0 %v438
        %478 = vmatprep.subr.mxu0 0.0
        %479 = vmatpush1.msra.mxu0 0.0
        %480 = vmatprep.subr.mxu0 0.0
        %481 = vmatpush1.msra.mxu0 0.0
        %482 = vmatprep.subr.mxu0 0.0
        %483 = vmatpush1.msra.mxu0 0.0
        %484 = vmatprep.subr.mxu0 0.0
        %485 = vmatpush1.msra.mxu0 0.0
        %486 = vmatprep.subr.mxu0 0.0
        %487 = vmatpush1.msra.mxu0 0.0
        %488 = vmatprep.subr.mxu0 0.0
        %489 = vmatpush1.msra.mxu0 0.0
        %490 = vmatprep.subr.mxu0 0.0
        %491 = vmatpush1.msra.mxu0 0.0
        %492 = vmatprep.subr.mxu0 0.0
        %493 = vmatpush1.msra.mxu0 0.0
        %494 = vmatprep.subr.mxu0 0.0
        %495 = vmatpush1.msra.mxu0 0.0
        %496 = vmatprep.subr.mxu0 0.0
        %497 = vmatpush1.msra.mxu0 0.0
        %498 = vmatprep.subr.mxu0 0.0
        %499 = vmatpush1.msra.mxu0 0.0
        %500 = vmatprep.subr.mxu0 0.0
        %501 = vmatpush1.msra.mxu0 0.0
        %502 = vmatprep.subr.mxu0 0.0
        %503 = vmatpush1.msra.mxu0 0.0
        %504 = vmatprep.subr.mxu0 0.0
        %505 = vmatpush1.msra.mxu0 0.0
        %506 = vmatprep.subr.mxu0 0.0
        %507 = vmatpush1.msra.mxu0 0.0
        %508 = vmatprep.subr.mxu0 0.0
        %509 = vmatpush1.msra.mxu0 0.0
        %510 = vmatprep.mubr.f32.mxu0 0.0
        %511 = vmatmul.mubr.f32.gmra.mrb[0].mxu0 %v422
        %v512 = vpop.f32.mrb[0].mxu0
        %v513 = vadd.f32 %v444, %v512
        %v514 = vpop.f32.mrb[0].mxu0
        %515 = vdwg.mxu0
        %v516 = vmax.f32 %v513, 0.0
        %v517 = vld [vmem:[#allocation8] sm:$0xff]
        %v518 = vld [vmem:[#allocation8 + $0x8] sm:$0xff]
        %v519 = vld [vmem:[#allocation8 + $0x10] sm:$0xff]
        %v520 = vld [vmem:[#allocation8 + $0x18] sm:$0xff]
        %v521 = vld [vmem:[#allocation8 + $0x20] sm:$0xff]
        %v522 = vld [vmem:[#allocation8 + $0x28] sm:$0xff]
        %v523 = vld [vmem:[#allocation8 + $0x30] sm:$0xff]
        %v524 = vld [vmem:[#allocation8 + $0x38] sm:$0xff]
        %v525 = vld [vmem:[#allocation8 + $0x40] sm:$0xff]
        %v526 = vld [vmem:[#allocation8 + $0x48] sm:$0xff]
        %v527 = vld [vmem:[#allocation8 + $0x50] sm:$0xff]
        %v528 = vld [vmem:[#allocation8 + $0x58] sm:$0xff]
        %v529 = vld [vmem:[#allocation8 + $0x60] sm:$0xff]
        %v530 = vld [vmem:[#allocation8 + $0x68] sm:$0xff]
        %v531 = vld [vmem:[#allocation8 + $0x70] sm:$0xff]
        %v532 = vld [vmem:[#allocation8 + $0x78] sm:$0xff]
        %v533 = vld [vmem:[%s6] sm:$0x1]
        %v535 = vlaneseq
        %v536 = vshrl.u32 %v535, 7
        %v537 = vsub.s32 0, %v536
        %v538 = vrot.slane %v533, %v537
        %540 = vmatprep.subr.mxu0 0.0
        %541 = vmatpush1.msra.mxu0 %v517
        %542 = vmatprep.subr.mxu0 0.0
        %543 = vmatpush1.msra.mxu0 %v518
        %544 = vmatprep.subr.mxu0 0.0
        %545 = vmatpush1.msra.mxu0 %v519
        %546 = vmatprep.subr.mxu0 0.0
        %547 = vmatpush1.msra.mxu0 %v520
        %548 = vmatprep.subr.mxu0 0.0
        %549 = vmatpush1.msra.mxu0 %v521
        %550 = vmatprep.subr.mxu0 0.0
        %551 = vmatpush1.msra.mxu0 %v522
        %552 = vmatprep.subr.mxu0 0.0
        %553 = vmatpush1.msra.mxu0 %v523
        %554 = vmatprep.subr.mxu0 0.0
        %555 = vmatpush1.msra.mxu0 %v524
        %556 = vmatprep.subr.mxu0 0.0
        %557 = vmatpush1.msra.mxu0 %v525
        %558 = vmatprep.subr.mxu0 0.0
        %559 = vmatpush1.msra.mxu0 %v526
        %560 = vmatprep.subr.mxu0 0.0
        %561 = vmatpush1.msra.mxu0 %v527
        %562 = vmatprep.subr.mxu0 0.0
        %563 = vmatpush1.msra.mxu0 %v528
        %564 = vmatprep.subr.mxu0 0.0
        %565 = vmatpush1.msra.mxu0 %v529
        %566 = vmatprep.subr.mxu0 0.0
        %567 = vmatpush1.msra.mxu0 %v530
        %568 = vmatprep.subr.mxu0 0.0
        %569 = vmatpush1.msra.mxu0 %v531
        %570 = vmatprep.subr.mxu0 0.0
        %571 = vmatpush1.msra.mxu0 %v532
        %572 = vmatprep.subr.mxu0 0.0
        %573 = vmatpush1.msra.mxu0 0.0
        %574 = vmatprep.subr.mxu0 0.0
        %575 = vmatpush1.msra.mxu0 0.0
        %576 = vmatprep.subr.mxu0 0.0
        %577 = vmatpush1.msra.mxu0 0.0
        %578 = vmatprep.subr.mxu0 0.0
        %579 = vmatpush1.msra.mxu0 0.0
        %580 = vmatprep.subr.mxu0 0.0
        %581 = vmatpush1.msra.mxu0 0.0
        %582 = vmatprep.subr.mxu0 0.0
        %583 = vmatpush1.msra.mxu0 0.0
        %584 = vmatprep.subr.mxu0 0.0
        %585 = vmatpush1.msra.mxu0 0.0
        %586 = vmatprep.subr.mxu0 0.0
        %587 = vmatpush1.msra.mxu0 0.0
        %588 = vmatprep.subr.mxu0 0.0
        %589 = vmatpush1.msra.mxu0 0.0
        %590 = vmatprep.subr.mxu0 0.0
        %591 = vmatpush1.msra.mxu0 0.0
        %592 = vmatprep.subr.mxu0 0.0
        %593 = vmatpush1.msra.mxu0 0.0
        %594 = vmatprep.subr.mxu0 0.0
        %595 = vmatpush1.msra.mxu0 0.0
        %596 = vmatprep.subr.mxu0 0.0
        %597 = vmatpush1.msra.mxu0 0.0
        %598 = vmatprep.subr.mxu0 0.0
        %599 = vmatpush1.msra.mxu0 0.0
        %600 = vmatprep.subr.mxu0 0.0
        %601 = vmatpush1.msra.mxu0 0.0
        %602 = vmatprep.subr.mxu0 0.0
        %603 = vmatpush1.msra.mxu0 0.0
        %604 = vmatprep.mubr.f32.mxu0 0.0
        %605 = vmatmul.mubr.f32.gmra.mrb[0].mxu0 %v516
        %v606 = vpop.f32.mrb[0].mxu0
        %v607 = vadd.f32 %v538, %v606
        %v608 = vpop.f32.mrb[0].mxu0
        %609 = vdwg.mxu0
        %610 = vst [vmem:[%s337] sm:$0xff] %v607
        %s611 = sand.u32 %s186, 1
        %s612 = scalar_lea.sflag [#allocation4], %s611
        %s613 = sand.u32 %s186, 1
        %s614 = smul.addr %s613, 8
        %s615 = scalar_lea.vmem [#allocation10], %s614
        // Predicated region
        $region65: #{tpu_custom_call.1} parent=47 // pred_check
          %p616 = pneg %p196
        $region66: #{tpu_custom_call.1} parent=47 // pred_check_branch
          %618 = sbr.rel (%p616) target = $region68
        $region67: #{tpu_custom_call.1} parent=47 // pred_region
          %s620 = ssub.s32 128, 128
          %621 = vsyncadd %s612, %s620
          %s622 = smul.addr %s26, 128
          %s623 = scalar_lea.hbm %s7, %s622
          %s625 = sshll.u32 %s615, 4
          %s626 = int_to_ptr.vmem [resolvable:$true] %s625
          %628 = dma.vmem_to_hbm [thread:$0]  %s626, 128, %s623, %s612
        $region68: #{tpu_custom_call.1} parent=47 // pred_fallthru
          _
      $region48: #{tpu_custom_call.1} parent=5 // pred_fallthru
        _
      %p629 = scmp.le.s32.totalorder 2, %s21
      // Predicated region
      $region69: #{tpu_custom_call.1} parent=5 // pred_check
        %p630 = pneg %p629
      $region70: #{tpu_custom_call.1} parent=5 // pred_check_branch
        %632 = sbr.rel (%p630) target = $region72
      $region71: #{tpu_custom_call.1} parent=5 // pred_region
        %s633 = ssub.s32 %s21, 2
        // Predicated region
        $region73: #{tpu_custom_call.1} parent=71 // pred_check
          %p634 = pneg %p202
        $region74: #{tpu_custom_call.1} parent=71 // pred_check_branch
          %636 = sbr.rel (%p634) target = $region76
        $region75: #{tpu_custom_call.1} parent=71 // pred_region
          %s637 = sand.u32 %s187, 1
          %s638 = scalar_lea.sflag [#allocation4], %s637
          %s639 = sand.u32 %s187, 1
          %s640 = smul.addr %s639, 8
          %s641 = scalar_lea.vmem [#allocation10], %s640
          %642 = dma.done %s638, 128
        $region76: #{tpu_custom_call.1} parent=71 // pred_fallthru
          _
      $region72: #{tpu_custom_call.1} parent=5 // pred_fallthru
        _
    $region6: #{tpu_custom_call.1} parent=1 // loop_footer
      %s25 = sadd.s32 1, %s21
    $region7: #{tpu_custom_call.1} parent=1 // loop_footer_branch
      %20 = sbr.rel target = $region3
    $region8: #{tpu_custom_call.1} parent=1 // loop_exit
      _
    %643 = vsyncpa [#allocation3], 1
    %s644 = scalar_lea.sflag [#allocation3], 1
    %645 = vsyncpa %s644, 1
    %646 = vsyncpa [#allocation6], 1
    %647 = vsyncpa [#allocation9], 1
    %648 = vsyncpa [#allocation4], 1
    %s649 = scalar_lea.sflag [#allocation4], 1
    %650 = vsyncpa %s649, 1

</llo_original>
